<compile_context>
chip_gen: v6e
topology: v6e:2x2x1
jax: 0.10.0
libtpu: 0.0.40
codegen_flags: <defaults>
</compile_context>

<pallas_src>
import functools
import math

import jax
import jax.numpy as jnp
from jax.experimental import pallas as pl
from jax.experimental.pallas import tpu as pltpu


def _gelu(x):
    # tanh-approx GELU lowers to the EUP (otherwise-idle VLIW slot) instead of
    # a VALU-heavy erf polynomial; max abs deviation from exact GELU ~1e-3.
    return jax.nn.gelu(x, approximate=True)


def _layer_norm(x, w, b, eps=1e-6):
    mean = jnp.mean(x, axis=-1, keepdims=True)
    var = jnp.mean(jnp.square(x - mean), axis=-1, keepdims=True)
    return (x - mean) * jax.lax.rsqrt(var + eps) * w + b


def ono_block_kernel(x_ref, fx_ref, pe_ref, mask_ref,
                     ln1_w_ref, ln1_b_ref,
                     wq_ref, wk_ref, wv_ref, wo_ref, bo_ref,
                     ln2_w_ref, ln2_b_ref,
                     w1_ref, b1_ref, w2_ref, b2_ref, w3_ref, b3_ref,
                     mu_ref,
                     x_out_ref, fx_out_ref,
                     *, dim_head):
    f32 = jnp.float32
    x_in = x_ref[...]          # (N, C)  (batch dim squeezed by BlockSpec)
    fx = fx_ref[...]           # (N, C)

    def wdot(a, w_ref):
        # bf16 operands, f32 accumulation on the MXU.
        return jnp.dot(a.astype(w_ref.dtype), w_ref[...],
                       preferred_element_type=f32)

    # ---- Attn branch: ln_1 + sinusoidal positional encoding ---------------
    xh = _layer_norm(x_in, ln1_w_ref[...], ln1_b_ref[...]) + pe_ref[...]

    # ---- linear self-attention (non-causal), all heads fused --------------
    scale = dim_head ** -0.25
    q = wdot(xh, wq_ref) * scale
    k = wdot(xh, wk_ref) * scale
    v = wdot(xh, wv_ref)

    mask = mask_ref[...]                       # (C, C) block-diagonal head mask

    # Per-head softmax of q over its head's features.  Subtracting the row max
    # (a per-row constant, hence constant within every head group) is
    # mathematically identical to subtracting the per-head max; the per-head
    # sum comes from one matmul against the block-diagonal mask, so no slices,
    # reshapes or concatenates are needed and everything stays lane-dense.
    q = jnp.exp(q - jnp.max(q, axis=-1, keepdims=True))
    q_den = jnp.dot(q, mask, preferred_element_type=f32)
    q = q * pl.reciprocal(q_den, approx=True)

    # Softmax of k over the sequence dim (per-column max is exact per head).
    k = jnp.exp(k - jnp.max(k, axis=0, keepdims=True))
    k = k * pl.reciprocal(jnp.sum(k, axis=0, keepdims=True), approx=True)

    # ctx = k^T v for all heads at once: contract axis 0 of both operands (no
    # explicit .T), then zero the cross-head blocks so q @ ctx reproduces the
    # per-head attention outputs already concatenated along C.
    ctx = jax.lax.dot_general(k, v, (((0,), (0,)), ((), ())),
                              preferred_element_type=f32) * mask        # (C, C)
    attn = jnp.dot(q, ctx, preferred_element_type=f32)                  # (N, C)
    attn = wdot(attn, wo_ref) + bo_ref[...]

    x2 = x_in + attn

    # ---- MLP branch --------------------------------------------------------
    y = _layer_norm(x2, ln2_w_ref[...], ln2_b_ref[...])
    y = _gelu(wdot(y, w1_ref) + b1_ref[...])
    y = _gelu(wdot(y, w2_ref) + b2_ref[...])
    y = wdot(y, w3_ref) + b3_ref[...]
    x3 = x2 + y

    # ---- ONO operator: fx = gelu((x*softplus(mu)) @ (x^T @ fx)) ------------
    # Kept in f32: data-dependent operands with larger dynamic range.
    mu_sp = jax.nn.softplus(mu_ref[...])                                 # (1, C)
    ktfx = jax.lax.dot_general(x3, fx, (((0,), (0,)), ((), ())),
                               preferred_element_type=f32)               # (C, C)
    fx_new = _gelu(jnp.dot(x3 * mu_sp, ktfx, preferred_element_type=f32))

    x_out_ref[...] = x3.astype(x_out_ref.dtype)
    fx_out_ref[...] = fx_new.astype(fx_out_ref.dtype)


def ono_block(x, fx, params, *, num_heads):
    B, N, C = x.shape
    dim_head = C // num_heads
    f32 = jnp.float32
    bf16 = jnp.bfloat16
    vec = lambda p: p.reshape(1, -1).astype(f32)
    wcast = lambda p: p.astype(bf16)

    # Block-diagonal head mask: 1 where both features belong to the same head.
    head_id = jnp.arange(C) // dim_head
    mask = (head_id[:, None] == head_id[None, :]).astype(f32)

    def full(shape):
        return pl.BlockSpec(shape, lambda b: (0,) * len(shape))

    batched = pl.BlockSpec((None, N, C), lambda b: (b, 0, 0))

    in_specs = [
        batched, batched, full((N, C)), full((C, C)),
        full((1, C)), full((1, C)),
        full((C, C)), full((C, C)), full((C, C)), full((C, C)), full((1, C)),
        full((1, C)), full((1, C)),
        full((C, 2 * C)), full((1, 2 * C)),
        full((2 * C, 2 * C)), full((1, 2 * C)),
        full((2 * C, C)), full((1, C)),
        full((1, C)),
    ]
    out_specs = [batched, batched]
    out_shape = [jax.ShapeDtypeStruct((B, N, C), x.dtype),
                 jax.ShapeDtypeStruct((B, N, C), fx.dtype)]

    # VMEM budget: double-buffered input/output blocks + bf16 weights + an
    # allowance for live in-kernel intermediates (a few (N,C)/(N,2C)/(C,C)
    # f32 temporaries).  v5e's default scoped limit is only 16 MiB.
    blk = N * C * 4
    w_bytes = 2 * (12 * C * C)                       # bf16 resident weights
    live = 10 * blk + 4 * (N * 2 * C * 4) + 3 * (C * C * 4)
    est = 2 * (5 * blk + C * C * 4 + w_bytes) + live
    vmem_limit = int(min(100 * 1024 * 1024, max(32 * 1024 * 1024, 2 * est)))

    kernel = functools.partial(ono_block_kernel, dim_head=dim_head)
    f = pl.pallas_call(
        kernel,
        out_shape=out_shape,
        grid_spec=pltpu.PrefetchScalarGridSpec(
            num_scalar_prefetch=0, grid=(B,),
            in_specs=in_specs, out_specs=out_specs),
        compiler_params=pltpu.CompilerParams(
            dimension_semantics=("parallel",),
            vmem_limit_bytes=vmem_limit),
    )
    args = [
        x, fx, params['pe'].astype(f32), mask,
        vec(params['ln1_w']), vec(params['ln1_b']),
        wcast(params['wq']), wcast(params['wk']), wcast(params['wv']),
        wcast(params['wo']), vec(params['bo']),
        vec(params['ln2_w']), vec(params['ln2_b']),
        wcast(params['w1']), vec(params['b1']),
        wcast(params['w2']), vec(params['b2']),
        wcast(params['w3']), vec(params['b3']),
        vec(params['mu']),
    ]
    return f(*args)


# ------------------------- parameter / PE setup ------------------------------
def make_positional_encoding(n, d):
    position = jnp.arange(n, dtype=jnp.float32)[:, None]
    div_term = jnp.exp(jnp.arange(0, d, 2, dtype=jnp.float32)
                       * (-math.log(10000.0) / d))
    ang = position * div_term
    pe = jnp.zeros((n, d), jnp.float32)
    pe = pe.at[:, 0::2].set(jnp.sin(ang))
    pe = pe.at[:, 1::2].set(jnp.cos(ang))
    return pe


def init_params(key, N, C):
    def tn(k, shape):   # trunc_normal_(std=0.02), truncated at +/- 2 std
        return 0.02 * jax.random.truncated_normal(k, -2.0, 2.0, shape, jnp.float32)

    ks = jax.random.split(key, 8)
    return {
        'pe': make_positional_encoding(N, C),
        'ln1_w': jnp.ones((C,), jnp.float32),
        'ln1_b': jnp.zeros((C,), jnp.float32),
        'wq': tn(ks[0], (C, C)),
        'wk': tn(ks[1], (C, C)),
        'wv': tn(ks[2], (C, C)),
        'wo': tn(ks[3], (C, C)),
        'bo': jnp.zeros((C,), jnp.float32),
        'ln2_w': jnp.ones((C,), jnp.float32),
        'ln2_b': jnp.zeros((C,), jnp.float32),
        'w1': tn(ks[4], (C, 2 * C)),
        'b1': jnp.zeros((2 * C,), jnp.float32),
        'w2': tn(ks[5], (2 * C, 2 * C)),
        'b2': jnp.zeros((2 * C,), jnp.float32),
        'w3': tn(ks[6], (2 * C, C)),
        'b3': jnp.zeros((C,), jnp.float32),
        'mu': jnp.zeros((C,), jnp.float32),
    }


# ------------------------- pure-JAX reference --------------------------------
def ono_block_ref(x, fx, p, num_heads):
    hp = jax.lax.Precision.HIGHEST
    B, N, C = x.shape
    dh = C // num_heads
    g = lambda z: jax.nn.gelu(z, approximate=False)

    def ln(z, w, b):
        m = z.mean(-1, keepdims=True)
        v = ((z - m) ** 2).mean(-1, keepdims=True)
        return (z - m) / jnp.sqrt(v + 1e-6) * w + b

    xh = ln(x, p['ln1_w'], p['ln1_b']) + p['pe'][None]
    q = jnp.einsum('bnc,cd->bnd', xh, p['wq'], precision=hp)
    k = jnp.einsum('bnc,cd->bnd', xh, p['wk'], precision=hp)
    v = jnp.einsum('bnc,cd->bnd', xh, p['wv'], precision=hp)
    split = lambda t: t.reshape(B, N, num_heads, dh).transpose(0, 2, 1, 3)
    q, k, v = map(split, (q, k, v))
    scale = dh ** -0.25
    q = jax.nn.softmax(q * scale, axis=-1)
    k = jax.nn.softmax(k * scale, axis=-2)
    ctx = jnp.einsum('bhnd,bhne->bhde', k, v, precision=hp)
    a = jnp.einsum('bhnd,bhde->bhne', q, ctx, precision=hp)
    a = a.transpose(0, 2, 1, 3).reshape(B, N, C)
    a = jnp.einsum('bnc,cd->bnd', a, p['wo'], precision=hp) + p['bo']
    x2 = x + a
    y = ln(x2, p['ln2_w'], p['ln2_b'])
    y = g(jnp.einsum('bnc,cd->bnd', y, p['w1'], precision=hp) + p['b1'])
    y = g(jnp.einsum('bnc,cd->bnd', y, p['w2'], precision=hp) + p['b2'])
    y = jnp.einsum('bnc,cd->bnd', y, p['w3'], precision=hp) + p['b3']
    x3 = x2 + y
    mu_sp = jax.nn.softplus(p['mu'])
    ktfx = jnp.einsum('bnc,bnd->bcd', x3, fx, precision=hp)
    fxo = g(jnp.einsum('bnc,bcd->bnd', x3 * mu_sp, ktfx, precision=hp))
    return x3, fxo


if __name__ == "__main__":
    B, N, C, H = 2, 16, 32, 4      # batch, sequence, hidden_dim, num_heads
    key = jax.random.PRNGKey(0)
    kx, kfx, kp = jax.random.split(key, 3)
    x = jax.random.normal(kx, (B, N, C), jnp.float32)
    fx = jax.random.normal(kfx, (B, N, C), jnp.float32)
    params = init_params(kp, N, C)

    x_out, fx_out = ono_block(x, fx, params, num_heads=H)
    jax.block_until_ready((x_out, fx_out))

    x_ref, fx_ref = ono_block_ref(x, fx, params, H)
    assert jnp.allclose(x_out, x_ref, atol=2e-2, rtol=2e-2)
    assert jnp.allclose(fx_out, fx_ref, atol=2e-2, rtol=2e-2)
    print("KERNEL_OK")
</pallas_src>

<mosaic_0001>
module attributes {stable_mosaic.version = 11 : i64} {
  func.func @ono_block_kernel(%arg0: i32, %arg1: memref<1x16x32xf32, #tpu.memory_space<vmem>>, %arg2: memref<1x16x32xf32, #tpu.memory_space<vmem>>, %arg3: memref<16x32xf32, #tpu.memory_space<vmem>>, %arg4: memref<32x32xf32, #tpu.memory_space<vmem>>, %arg5: memref<1x32xf32, #tpu.memory_space<vmem>>, %arg6: memref<1x32xf32, #tpu.memory_space<vmem>>, %arg7: memref<32x32xbf16, #tpu.memory_space<vmem>>, %arg8: memref<32x32xbf16, #tpu.memory_space<vmem>>, %arg9: memref<32x32xbf16, #tpu.memory_space<vmem>>, %arg10: memref<32x32xbf16, #tpu.memory_space<vmem>>, %arg11: memref<1x32xf32, #tpu.memory_space<vmem>>, %arg12: memref<1x32xf32, #tpu.memory_space<vmem>>, %arg13: memref<1x32xf32, #tpu.memory_space<vmem>>, %arg14: memref<32x64xbf16, #tpu.memory_space<vmem>>, %arg15: memref<1x64xf32, #tpu.memory_space<vmem>>, %arg16: memref<64x64xbf16, #tpu.memory_space<vmem>>, %arg17: memref<1x64xf32, #tpu.memory_space<vmem>>, %arg18: memref<64x32xbf16, #tpu.memory_space<vmem>>, %arg19: memref<1x32xf32, #tpu.memory_space<vmem>>, %arg20: memref<1x32xf32, #tpu.memory_space<vmem>>, %arg21: memref<1x16x32xf32, #tpu.memory_space<vmem>>, %arg22: memref<1x16x32xf32, #tpu.memory_space<vmem>>) attributes {dimension_semantics = [#tpu.dimension_semantics<parallel>], iteration_bounds = array<i64: 2>, scalar_prefetch = 0 : i64, scratch_operands = 0 : i64, tpu.core_type = #tpu.core_type<tc>, window_params = [{transform_indices = @transform_0, window_bounds = array<i64: 1, 16, 32>}, {transform_indices = @transform_1, window_bounds = array<i64: 1, 16, 32>}, {pipeline_mode = #tpu.pipeline_mode<synchronous>, transform_indices = @transform_2, window_bounds = array<i64: 16, 32>}, {pipeline_mode = #tpu.pipeline_mode<synchronous>, transform_indices = @transform_3, window_bounds = array<i64: 32, 32>}, {pipeline_mode = #tpu.pipeline_mode<synchronous>, transform_indices = @transform_4, window_bounds = array<i64: 1, 32>}, {pipeline_mode = #tpu.pipeline_mode<synchronous>, transform_indices = @transform_5, window_bounds = array<i64: 1, 32>}, {pipeline_mode = #tpu.pipeline_mode<synchronous>, transform_indices = @transform_6, window_bounds = array<i64: 32, 32>}, {pipeline_mode = #tpu.pipeline_mode<synchronous>, transform_indices = @transform_7, window_bounds = array<i64: 32, 32>}, {pipeline_mode = #tpu.pipeline_mode<synchronous>, transform_indices = @transform_8, window_bounds = array<i64: 32, 32>}, {pipeline_mode = #tpu.pipeline_mode<synchronous>, transform_indices = @transform_9, window_bounds = array<i64: 32, 32>}, {pipeline_mode = #tpu.pipeline_mode<synchronous>, transform_indices = @transform_10, window_bounds = array<i64: 1, 32>}, {pipeline_mode = #tpu.pipeline_mode<synchronous>, transform_indices = @transform_11, window_bounds = array<i64: 1, 32>}, {pipeline_mode = #tpu.pipeline_mode<synchronous>, transform_indices = @transform_12, window_bounds = array<i64: 1, 32>}, {pipeline_mode = #tpu.pipeline_mode<synchronous>, transform_indices = @transform_13, window_bounds = array<i64: 32, 64>}, {pipeline_mode = #tpu.pipeline_mode<synchronous>, transform_indices = @transform_14, window_bounds = array<i64: 1, 64>}, {pipeline_mode = #tpu.pipeline_mode<synchronous>, transform_indices = @transform_15, window_bounds = array<i64: 64, 64>}, {pipeline_mode = #tpu.pipeline_mode<synchronous>, transform_indices = @transform_16, window_bounds = array<i64: 1, 64>}, {pipeline_mode = #tpu.pipeline_mode<synchronous>, transform_indices = @transform_17, window_bounds = array<i64: 64, 32>}, {pipeline_mode = #tpu.pipeline_mode<synchronous>, transform_indices = @transform_18, window_bounds = array<i64: 1, 32>}, {pipeline_mode = #tpu.pipeline_mode<synchronous>, transform_indices = @transform_19, window_bounds = array<i64: 1, 32>}, {transform_indices = @transform_20, window_bounds = array<i64: 1, 16, 32>}, {transform_indices = @transform_21, window_bounds = array<i64: 1, 16, 32>}]} {
    %c0 = arith.constant 0 : index
    %c0_0 = arith.constant 0 : index
    %c0_1 = arith.constant 0 : index
    %0 = vector.load %arg1[%c0, %c0_0, %c0_1] : memref<1x16x32xf32, #tpu.memory_space<vmem>>, vector<1x16x32xf32>
    %1 = vector.shape_cast %0 : vector<1x16x32xf32> to vector<16x32xf32>
    %c0_2 = arith.constant 0 : index
    %c0_3 = arith.constant 0 : index
    %c0_4 = arith.constant 0 : index
    %2 = vector.load %arg2[%c0_2, %c0_3, %c0_4] : memref<1x16x32xf32, #tpu.memory_space<vmem>>, vector<1x16x32xf32>
    %3 = vector.shape_cast %2 : vector<1x16x32xf32> to vector<16x32xf32>
    %c0_5 = arith.constant 0 : index
    %c0_6 = arith.constant 0 : index
    %4 = vector.load %arg5[%c0_5, %c0_6] : memref<1x32xf32, #tpu.memory_space<vmem>>, vector<1x32xf32>
    %c0_7 = arith.constant 0 : index
    %c0_8 = arith.constant 0 : index
    %5 = vector.load %arg6[%c0_7, %c0_8] : memref<1x32xf32, #tpu.memory_space<vmem>>, vector<1x32xf32>
    %cst = arith.constant dense<0.000000e+00> : vector<16xf32>
    %6 = vector.multi_reduction <add>, %1, %cst [1] : vector<16x32xf32> to vector<16xf32>
    %7 = vector.shape_cast %6 : vector<16xf32> to vector<16x1xf32>
    %cst_9 = arith.constant 3.200000e+01 : f32
    %8 = vector.broadcast %cst_9 : f32 to vector<16x1xf32>
    %9 = arith.divf %7, %8 : vector<16x1xf32>
    %10 = vector.broadcast %9 : vector<16x1xf32> to vector<16x32xf32>
    %11 = arith.subf %1, %10 : vector<16x32xf32>
    %12 = arith.mulf %11, %11 : vector<16x32xf32>
    %cst_10 = arith.constant dense<0.000000e+00> : vector<16xf32>
    %13 = vector.multi_reduction <add>, %12, %cst_10 [1] : vector<16x32xf32> to vector<16xf32>
    %14 = vector.shape_cast %13 : vector<16xf32> to vector<16x1xf32>
    %cst_11 = arith.constant 3.200000e+01 : f32
    %15 = vector.broadcast %cst_11 : f32 to vector<16x1xf32>
    %16 = arith.divf %14, %15 : vector<16x1xf32>
    %17 = vector.broadcast %9 : vector<16x1xf32> to vector<16x32xf32>
    %18 = arith.subf %1, %17 : vector<16x32xf32>
    %cst_12 = arith.constant 9.99999997E-7 : f32
    %19 = vector.broadcast %cst_12 : f32 to vector<16x1xf32>
    %20 = arith.addf %16, %19 : vector<16x1xf32>
    %21 = math.rsqrt %20 : vector<16x1xf32>
    %22 = vector.broadcast %21 : vector<16x1xf32> to vector<16x32xf32>
    %23 = arith.mulf %18, %22 : vector<16x32xf32>
    %24 = vector.broadcast %4 : vector<1x32xf32> to vector<16x32xf32>
    %25 = arith.mulf %23, %24 : vector<16x32xf32>
    %26 = vector.broadcast %5 : vector<1x32xf32> to vector<16x32xf32>
    %27 = arith.addf %25, %26 : vector<16x32xf32>
    %c0_13 = arith.constant 0 : index
    %c0_14 = arith.constant 0 : index
    %28 = vector.load %arg3[%c0_13, %c0_14] : memref<16x32xf32, #tpu.memory_space<vmem>>, vector<16x32xf32>
    %29 = arith.addf %27, %28 : vector<16x32xf32>
    %30 = arith.truncf %29 : vector<16x32xf32> to vector<16x32xbf16>
    %c0_15 = arith.constant 0 : index
    %c0_16 = arith.constant 0 : index
    %31 = vector.load %arg7[%c0_15, %c0_16] : memref<32x32xbf16, #tpu.memory_space<vmem>>, vector<32x32xbf16>
    %cst_17 = arith.constant dense<0.000000e+00> : vector<16x32xf32>
    %32 = tpu.matmul %30, %31, %cst_17 {dimension_numbers = #tpu.dot_dimension_numbers<[1], [0], [0], [1], [0, 0, 1, 1], [], []>} : vector<16x32xbf16>, vector<32x32xbf16>, vector<16x32xf32> -> vector<16x32xf32>
    %cst_18 = arith.constant 0.594603539 : f32
    %33 = vector.broadcast %cst_18 : f32 to vector<16x32xf32>
    %34 = arith.mulf %32, %33 : vector<16x32xf32>
    %35 = arith.truncf %29 : vector<16x32xf32> to vector<16x32xbf16>
    %c0_19 = arith.constant 0 : index
    %c0_20 = arith.constant 0 : index
    %36 = vector.load %arg8[%c0_19, %c0_20] : memref<32x32xbf16, #tpu.memory_space<vmem>>, vector<32x32xbf16>
    %cst_21 = arith.constant dense<0.000000e+00> : vector<16x32xf32>
    %37 = tpu.matmul %35, %36, %cst_21 {dimension_numbers = #tpu.dot_dimension_numbers<[1], [0], [0], [1], [0, 0, 1, 1], [], []>} : vector<16x32xbf16>, vector<32x32xbf16>, vector<16x32xf32> -> vector<16x32xf32>
    %cst_22 = arith.constant 0.594603539 : f32
    %38 = vector.broadcast %cst_22 : f32 to vector<16x32xf32>
    %39 = arith.mulf %37, %38 : vector<16x32xf32>
    %40 = arith.truncf %29 : vector<16x32xf32> to vector<16x32xbf16>
    %c0_23 = arith.constant 0 : index
    %c0_24 = arith.constant 0 : index
    %41 = vector.load %arg9[%c0_23, %c0_24] : memref<32x32xbf16, #tpu.memory_space<vmem>>, vector<32x32xbf16>
    %cst_25 = arith.constant dense<0.000000e+00> : vector<16x32xf32>
    %42 = tpu.matmul %40, %41, %cst_25 {dimension_numbers = #tpu.dot_dimension_numbers<[1], [0], [0], [1], [0, 0, 1, 1], [], []>} : vector<16x32xbf16>, vector<32x32xbf16>, vector<16x32xf32> -> vector<16x32xf32>
    %c0_26 = arith.constant 0 : index
    %c0_27 = arith.constant 0 : index
    %43 = vector.load %arg4[%c0_26, %c0_27] : memref<32x32xf32, #tpu.memory_space<vmem>>, vector<32x32xf32>
    %cst_28 = arith.constant dense<0xFF800000> : vector<16xf32>
    %44 = vector.multi_reduction <maximumf>, %34, %cst_28 [1] : vector<16x32xf32> to vector<16xf32>
    %45 = vector.shape_cast %44 : vector<16xf32> to vector<16x1xf32>
    %46 = vector.broadcast %45 : vector<16x1xf32> to vector<16x32xf32>
    %47 = arith.subf %34, %46 : vector<16x32xf32>
    %48 = math.exp %47 : vector<16x32xf32>
    %cst_29 = arith.constant dense<0.000000e+00> : vector<16x32xf32>
    %49 = tpu.matmul %48, %43, %cst_29 {dimension_numbers = #tpu.dot_dimension_numbers<[1], [0], [0], [1], [0, 0, 1, 1], [], []>} : vector<16x32xf32>, vector<32x32xf32>, vector<16x32xf32> -> vector<16x32xf32>
    %50 = tpu.reciprocal %49 {approx = true} : vector<16x32xf32> -> vector<16x32xf32>
    %51 = arith.mulf %48, %50 : vector<16x32xf32>
    %cst_30 = arith.constant dense<0xFF800000> : vector<32xf32>
    %52 = vector.multi_reduction <maximumf>, %39, %cst_30 [0] : vector<16x32xf32> to vector<32xf32>
    %53 = vector.shape_cast %52 : vector<32xf32> to vector<1x32xf32>
    %54 = vector.broadcast %53 : vector<1x32xf32> to vector<16x32xf32>
    %55 = arith.subf %39, %54 : vector<16x32xf32>
    %56 = math.exp %55 : vector<16x32xf32>
    %cst_31 = arith.constant dense<0.000000e+00> : vector<32xf32>
    %57 = vector.multi_reduction <add>, %56, %cst_31 [0] : vector<16x32xf32> to vector<32xf32>
    %58 = vector.shape_cast %57 : vector<32xf32> to vector<1x32xf32>
    %59 = tpu.reciprocal %58 {approx = true} : vector<1x32xf32> -> vector<1x32xf32>
    %60 = vector.broadcast %59 : vector<1x32xf32> to vector<16x32xf32>
    %61 = arith.mulf %56, %60 : vector<16x32xf32>
    %cst_32 = arith.constant dense<0.000000e+00> : vector<32x32xf32>
    %62 = tpu.matmul %61, %42, %cst_32 {dimension_numbers = #tpu.dot_dimension_numbers<[0], [0], [1], [1], [0, 1, 1, 1], [], []>} : vector<16x32xf32>, vector<16x32xf32>, vector<32x32xf32> -> vector<32x32xf32>
    %63 = arith.mulf %62, %43 : vector<32x32xf32>
    %cst_33 = arith.constant dense<0.000000e+00> : vector<16x32xf32>
    %64 = tpu.matmul %51, %63, %cst_33 {dimension_numbers = #tpu.dot_dimension_numbers<[1], [0], [0], [1], [0, 0, 1, 1], [], []>} : vector<16x32xf32>, vector<32x32xf32>, vector<16x32xf32> -> vector<16x32xf32>
    %65 = arith.truncf %64 : vector<16x32xf32> to vector<16x32xbf16>
    %c0_34 = arith.constant 0 : index
    %c0_35 = arith.constant 0 : index
    %66 = vector.load %arg10[%c0_34, %c0_35] : memref<32x32xbf16, #tpu.memory_space<vmem>>, vector<32x32xbf16>
    %cst_36 = arith.constant dense<0.000000e+00> : vector<16x32xf32>
    %67 = tpu.matmul %65, %66, %cst_36 {dimension_numbers = #tpu.dot_dimension_numbers<[1], [0], [0], [1], [0, 0, 1, 1], [], []>} : vector<16x32xbf16>, vector<32x32xbf16>, vector<16x32xf32> -> vector<16x32xf32>
    %c0_37 = arith.constant 0 : index
    %c0_38 = arith.constant 0 : index
    %68 = vector.load %arg11[%c0_37, %c0_38] : memref<1x32xf32, #tpu.memory_space<vmem>>, vector<1x32xf32>
    %69 = vector.broadcast %68 : vector<1x32xf32> to vector<16x32xf32>
    %70 = arith.addf %67, %69 : vector<16x32xf32>
    %71 = arith.addf %1, %70 : vector<16x32xf32>
    %c0_39 = arith.constant 0 : index
    %c0_40 = arith.constant 0 : index
    %72 = vector.load %arg12[%c0_39, %c0_40] : memref<1x32xf32, #tpu.memory_space<vmem>>, vector<1x32xf32>
    %c0_41 = arith.constant 0 : index
    %c0_42 = arith.constant 0 : index
    %73 = vector.load %arg13[%c0_41, %c0_42] : memref<1x32xf32, #tpu.memory_space<vmem>>, vector<1x32xf32>
    %cst_43 = arith.constant dense<0.000000e+00> : vector<16xf32>
    %74 = vector.multi_reduction <add>, %71, %cst_43 [1] : vector<16x32xf32> to vector<16xf32>
    %75 = vector.shape_cast %74 : vector<16xf32> to vector<16x1xf32>
    %cst_44 = arith.constant 3.200000e+01 : f32
    %76 = vector.broadcast %cst_44 : f32 to vector<16x1xf32>
    %77 = arith.divf %75, %76 : vector<16x1xf32>
    %78 = vector.broadcast %77 : vector<16x1xf32> to vector<16x32xf32>
    %79 = arith.subf %71, %78 : vector<16x32xf32>
    %80 = arith.mulf %79, %79 : vector<16x32xf32>
    %cst_45 = arith.constant dense<0.000000e+00> : vector<16xf32>
    %81 = vector.multi_reduction <add>, %80, %cst_45 [1] : vector<16x32xf32> to vector<16xf32>
    %82 = vector.shape_cast %81 : vector<16xf32> to vector<16x1xf32>
    %cst_46 = arith.constant 3.200000e+01 : f32
    %83 = vector.broadcast %cst_46 : f32 to vector<16x1xf32>
    %84 = arith.divf %82, %83 : vector<16x1xf32>
    %85 = vector.broadcast %77 : vector<16x1xf32> to vector<16x32xf32>
    %86 = arith.subf %71, %85 : vector<16x32xf32>
    %cst_47 = arith.constant 9.99999997E-7 : f32
    %87 = vector.broadcast %cst_47 : f32 to vector<16x1xf32>
    %88 = arith.addf %84, %87 : vector<16x1xf32>
    %89 = math.rsqrt %88 : vector<16x1xf32>
    %90 = vector.broadcast %89 : vector<16x1xf32> to vector<16x32xf32>
    %91 = arith.mulf %86, %90 : vector<16x32xf32>
    %92 = vector.broadcast %72 : vector<1x32xf32> to vector<16x32xf32>
    %93 = arith.mulf %91, %92 : vector<16x32xf32>
    %94 = vector.broadcast %73 : vector<1x32xf32> to vector<16x32xf32>
    %95 = arith.addf %93, %94 : vector<16x32xf32>
    %96 = arith.truncf %95 : vector<16x32xf32> to vector<16x32xbf16>
    %c0_48 = arith.constant 0 : index
    %c0_49 = arith.constant 0 : index
    %97 = vector.load %arg14[%c0_48, %c0_49] : memref<32x64xbf16, #tpu.memory_space<vmem>>, vector<32x64xbf16>
    %cst_50 = arith.constant dense<0.000000e+00> : vector<16x64xf32>
    %98 = tpu.matmul %96, %97, %cst_50 {dimension_numbers = #tpu.dot_dimension_numbers<[1], [0], [0], [1], [0, 0, 1, 1], [], []>} : vector<16x32xbf16>, vector<32x64xbf16>, vector<16x64xf32> -> vector<16x64xf32>
    %c0_51 = arith.constant 0 : index
    %c0_52 = arith.constant 0 : index
    %99 = vector.load %arg15[%c0_51, %c0_52] : memref<1x64xf32, #tpu.memory_space<vmem>>, vector<1x64xf32>
    %100 = vector.broadcast %99 : vector<1x64xf32> to vector<16x64xf32>
    %101 = arith.addf %98, %100 : vector<16x64xf32>
    %102 = arith.mulf %101, %101 : vector<16x64xf32>
    %103 = arith.mulf %101, %102 : vector<16x64xf32>
    %cst_53 = arith.constant 4.471500e-02 : f32
    %104 = vector.broadcast %cst_53 : f32 to vector<16x64xf32>
    %105 = arith.mulf %104, %103 : vector<16x64xf32>
    %106 = arith.addf %101, %105 : vector<16x64xf32>
    %cst_54 = arith.constant 0.797884583 : f32
    %107 = vector.broadcast %cst_54 : f32 to vector<16x64xf32>
    %108 = arith.mulf %107, %106 : vector<16x64xf32>
    %109 = math.tanh %108 : vector<16x64xf32>
    %cst_55 = arith.constant 1.000000e+00 : f32
    %110 = vector.broadcast %cst_55 : f32 to vector<16x64xf32>
    %111 = arith.addf %110, %109 : vector<16x64xf32>
    %cst_56 = arith.constant 5.000000e-01 : f32
    %112 = vector.broadcast %cst_56 : f32 to vector<16x64xf32>
    %113 = arith.mulf %112, %111 : vector<16x64xf32>
    %114 = arith.mulf %101, %113 : vector<16x64xf32>
    %115 = arith.truncf %114 : vector<16x64xf32> to vector<16x64xbf16>
    %c0_57 = arith.constant 0 : index
    %c0_58 = arith.constant 0 : index
    %116 = vector.load %arg16[%c0_57, %c0_58] : memref<64x64xbf16, #tpu.memory_space<vmem>>, vector<64x64xbf16>
    %cst_59 = arith.constant dense<0.000000e+00> : vector<16x64xf32>
    %117 = tpu.matmul %115, %116, %cst_59 {dimension_numbers = #tpu.dot_dimension_numbers<[1], [0], [0], [1], [0, 0, 1, 1], [], []>} : vector<16x64xbf16>, vector<64x64xbf16>, vector<16x64xf32> -> vector<16x64xf32>
    %c0_60 = arith.constant 0 : index
    %c0_61 = arith.constant 0 : index
    %118 = vector.load %arg17[%c0_60, %c0_61] : memref<1x64xf32, #tpu.memory_space<vmem>>, vector<1x64xf32>
    %119 = vector.broadcast %118 : vector<1x64xf32> to vector<16x64xf32>
    %120 = arith.addf %117, %119 : vector<16x64xf32>
    %121 = arith.mulf %120, %120 : vector<16x64xf32>
    %122 = arith.mulf %120, %121 : vector<16x64xf32>
    %cst_62 = arith.constant 4.471500e-02 : f32
    %123 = vector.broadcast %cst_62 : f32 to vector<16x64xf32>
    %124 = arith.mulf %123, %122 : vector<16x64xf32>
    %125 = arith.addf %120, %124 : vector<16x64xf32>
    %cst_63 = arith.constant 0.797884583 : f32
    %126 = vector.broadcast %cst_63 : f32 to vector<16x64xf32>
    %127 = arith.mulf %126, %125 : vector<16x64xf32>
    %128 = math.tanh %127 : vector<16x64xf32>
    %cst_64 = arith.constant 1.000000e+00 : f32
    %129 = vector.broadcast %cst_64 : f32 to vector<16x64xf32>
    %130 = arith.addf %129, %128 : vector<16x64xf32>
    %cst_65 = arith.constant 5.000000e-01 : f32
    %131 = vector.broadcast %cst_65 : f32 to vector<16x64xf32>
    %132 = arith.mulf %131, %130 : vector<16x64xf32>
    %133 = arith.mulf %120, %132 : vector<16x64xf32>
    %134 = arith.truncf %133 : vector<16x64xf32> to vector<16x64xbf16>
    %c0_66 = arith.constant 0 : index
    %c0_67 = arith.constant 0 : index
    %135 = vector.load %arg18[%c0_66, %c0_67] : memref<64x32xbf16, #tpu.memory_space<vmem>>, vector<64x32xbf16>
    %cst_68 = arith.constant dense<0.000000e+00> : vector<16x32xf32>
    %136 = tpu.matmul %134, %135, %cst_68 {dimension_numbers = #tpu.dot_dimension_numbers<[1], [0], [0], [1], [0, 0, 1, 1], [], []>} : vector<16x64xbf16>, vector<64x32xbf16>, vector<16x32xf32> -> vector<16x32xf32>
    %c0_69 = arith.constant 0 : index
    %c0_70 = arith.constant 0 : index
    %137 = vector.load %arg19[%c0_69, %c0_70] : memref<1x32xf32, #tpu.memory_space<vmem>>, vector<1x32xf32>
    %138 = vector.broadcast %137 : vector<1x32xf32> to vector<16x32xf32>
    %139 = arith.addf %136, %138 : vector<16x32xf32>
    %140 = arith.addf %71, %139 : vector<16x32xf32>
    %c0_71 = arith.constant 0 : index
    %c0_72 = arith.constant 0 : index
    %141 = vector.load %arg20[%c0_71, %c0_72] : memref<1x32xf32, #tpu.memory_space<vmem>>, vector<1x32xf32>
    %cst_73 = arith.constant 0.000000e+00 : f32
    %142 = vector.broadcast %cst_73 : f32 to vector<1x32xf32>
    %143 = arith.maximumf %141, %142 : vector<1x32xf32>
    %144 = vector.broadcast %cst_73 : f32 to vector<1x32xf32>
    %145 = arith.subf %141, %144 : vector<1x32xf32>
    %146 = arith.cmpf one, %145, %145 : vector<1x32xf32>
    %147 = vector.broadcast %cst_73 : f32 to vector<1x32xf32>
    %148 = arith.addf %141, %147 : vector<1x32xf32>
    %149 = math.absf %145 : vector<1x32xf32>
    %cst_74 = arith.constant 0.000000e+00 : f32
    %150 = vector.broadcast %cst_74 : f32 to vector<1x32xf32>
    %151 = arith.subf %150, %149 : vector<1x32xf32>
    %152 = math.exp %151 : vector<1x32xf32>
    %153 = math.log1p %152 : vector<1x32xf32>
    %154 = arith.addf %143, %153 : vector<1x32xf32>
    %155 = arith.select %146, %148, %154 : vector<1x32xi1>, vector<1x32xf32>
    %cst_75 = arith.constant dense<0.000000e+00> : vector<32x32xf32>
    %156 = tpu.matmul %140, %3, %cst_75 {dimension_numbers = #tpu.dot_dimension_numbers<[0], [0], [1], [1], [0, 1, 1, 1], [], []>} : vector<16x32xf32>, vector<16x32xf32>, vector<32x32xf32> -> vector<32x32xf32>
    %157 = vector.broadcast %155 : vector<1x32xf32> to vector<16x32xf32>
    %158 = arith.mulf %140, %157 : vector<16x32xf32>
    %cst_76 = arith.constant dense<0.000000e+00> : vector<16x32xf32>
    %159 = tpu.matmul %158, %156, %cst_76 {dimension_numbers = #tpu.dot_dimension_numbers<[1], [0], [0], [1], [0, 0, 1, 1], [], []>} : vector<16x32xf32>, vector<32x32xf32>, vector<16x32xf32> -> vector<16x32xf32>
    %160 = arith.mulf %159, %159 : vector<16x32xf32>
    %161 = arith.mulf %159, %160 : vector<16x32xf32>
    %cst_77 = arith.constant 4.471500e-02 : f32
    %162 = vector.broadcast %cst_77 : f32 to vector<16x32xf32>
    %163 = arith.mulf %162, %161 : vector<16x32xf32>
    %164 = arith.addf %159, %163 : vector<16x32xf32>
    %cst_78 = arith.constant 0.797884583 : f32
    %165 = vector.broadcast %cst_78 : f32 to vector<16x32xf32>
    %166 = arith.mulf %165, %164 : vector<16x32xf32>
    %167 = math.tanh %166 : vector<16x32xf32>
    %cst_79 = arith.constant 1.000000e+00 : f32
    %168 = vector.broadcast %cst_79 : f32 to vector<16x32xf32>
    %169 = arith.addf %168, %167 : vector<16x32xf32>
    %cst_80 = arith.constant 5.000000e-01 : f32
    %170 = vector.broadcast %cst_80 : f32 to vector<16x32xf32>
    %171 = arith.mulf %170, %169 : vector<16x32xf32>
    %172 = arith.mulf %159, %171 : vector<16x32xf32>
    %c0_81 = arith.constant 0 : index
    %c0_82 = arith.constant 0 : index
    %c0_83 = arith.constant 0 : index
    %173 = vector.load %arg21[%c0_81, %c0_82, %c0_83] : memref<1x16x32xf32, #tpu.memory_space<vmem>>, vector<1x16x32xf32>
    %174 = vector.shape_cast %173 : vector<1x16x32xf32> to vector<16x32xf32>
    %175 = vector.shape_cast %140 : vector<16x32xf32> to vector<1x16x32xf32>
    tpu.vector_store %arg21[%c0_81, %c0_82, %c0_83], %175 {strides = array<i32>} : memref<1x16x32xf32, #tpu.memory_space<vmem>>, vector<1x16x32xf32>,
    %c0_84 = arith.constant 0 : index
    %c0_85 = arith.constant 0 : index
    %c0_86 = arith.constant 0 : index
    %176 = vector.load %arg22[%c0_84, %c0_85, %c0_86] : memref<1x16x32xf32, #tpu.memory_space<vmem>>, vector<1x16x32xf32>
    %177 = vector.shape_cast %176 : vector<1x16x32xf32> to vector<16x32xf32>
    %178 = vector.shape_cast %172 : vector<16x32xf32> to vector<1x16x32xf32>
    tpu.vector_store %arg22[%c0_84, %c0_85, %c0_86], %178 {strides = array<i32>} : memref<1x16x32xf32, #tpu.memory_space<vmem>>, vector<1x16x32xf32>,
    return
  }
  func.func @transform_0(%arg0: i32) -> (i32, i32, i32) {
    %c0_i32 = arith.constant 0 : i32
    %c0_i32_0 = arith.constant 0 : i32
    %c0_i32_1 = arith.constant 0 : i32
    return %arg0, %c0_i32, %c0_i32_0 : i32, i32, i32
  }
  func.func @transform_1(%arg0: i32) -> (i32, i32, i32) {
    %c0_i32 = arith.constant 0 : i32
    %c0_i32_0 = arith.constant 0 : i32
    %c0_i32_1 = arith.constant 0 : i32
    return %arg0, %c0_i32, %c0_i32_0 : i32, i32, i32
  }
  func.func @transform_2(%arg0: i32) -> (i32, i32) {
    %c0_i32 = arith.constant 0 : i32
    %c0_i32_0 = arith.constant 0 : i32
    %c0_i32_1 = arith.constant 0 : i32
    return %c0_i32, %c0_i32_0 : i32, i32
  }
  func.func @transform_3(%arg0: i32) -> (i32, i32) {
    %c0_i32 = arith.constant 0 : i32
    %c0_i32_0 = arith.constant 0 : i32
    %c0_i32_1 = arith.constant 0 : i32
    return %c0_i32, %c0_i32_0 : i32, i32
  }
  func.func @transform_4(%arg0: i32) -> (i32, i32) {
    %c0_i32 = arith.constant 0 : i32
    %c0_i32_0 = arith.constant 0 : i32
    %c0_i32_1 = arith.constant 0 : i32
    return %c0_i32, %c0_i32_0 : i32, i32
  }
  func.func @transform_5(%arg0: i32) -> (i32, i32) {
    %c0_i32 = arith.constant 0 : i32
    %c0_i32_0 = arith.constant 0 : i32
    %c0_i32_1 = arith.constant 0 : i32
    return %c0_i32, %c0_i32_0 : i32, i32
  }
  func.func @transform_6(%arg0: i32) -> (i32, i32) {
    %c0_i32 = arith.constant 0 : i32
    %c0_i32_0 = arith.constant 0 : i32
    %c0_i32_1 = arith.constant 0 : i32
    return %c0_i32, %c0_i32_0 : i32, i32
  }
  func.func @transform_7(%arg0: i32) -> (i32, i32) {
    %c0_i32 = arith.constant 0 : i32
    %c0_i32_0 = arith.constant 0 : i32
    %c0_i32_1 = arith.constant 0 : i32
    return %c0_i32, %c0_i32_0 : i32, i32
  }
  func.func @transform_8(%arg0: i32) -> (i32, i32) {
    %c0_i32 = arith.constant 0 : i32
    %c0_i32_0 = arith.constant 0 : i32
    %c0_i32_1 = arith.constant 0 : i32
    return %c0_i32, %c0_i32_0 : i32, i32
  }
  func.func @transform_9(%arg0: i32) -> (i32, i32) {
    %c0_i32 = arith.constant 0 : i32
    %c0_i32_0 = arith.constant 0 : i32
    %c0_i32_1 = arith.constant 0 : i32
    return %c0_i32, %c0_i32_0 : i32, i32
  }
  func.func @transform_10(%arg0: i32) -> (i32, i32) {
    %c0_i32 = arith.constant 0 : i32
    %c0_i32_0 = arith.constant 0 : i32
    %c0_i32_1 = arith.constant 0 : i32
    return %c0_i32, %c0_i32_0 : i32, i32
  }
  func.func @transform_11(%arg0: i32) -> (i32, i32) {
    %c0_i32 = arith.constant 0 : i32
    %c0_i32_0 = arith.constant 0 : i32
    %c0_i32_1 = arith.constant 0 : i32
    return %c0_i32, %c0_i32_0 : i32, i32
  }
  func.func @transform_12(%arg0: i32) -> (i32, i32) {
    %c0_i32 = arith.constant 0 : i32
    %c0_i32_0 = arith.constant 0 : i32
    %c0_i32_1 = arith.constant 0 : i32
    return %c0_i32, %c0_i32_0 : i32, i32
  }
  func.func @transform_13(%arg0: i32) -> (i32, i32) {
    %c0_i32 = arith.constant 0 : i32
    %c0_i32_0 = arith.constant 0 : i32
    %c0_i32_1 = arith.constant 0 : i32
    return %c0_i32, %c0_i32_0 : i32, i32
  }
  func.func @transform_14(%arg0: i32) -> (i32, i32) {
    %c0_i32 = arith.constant 0 : i32
    %c0_i32_0 = arith.constant 0 : i32
    %c0_i32_1 = arith.constant 0 : i32
    return %c0_i32, %c0_i32_0 : i32, i32
  }
  func.func @transform_15(%arg0: i32) -> (i32, i32) {
    %c0_i32 = arith.constant 0 : i32
    %c0_i32_0 = arith.constant 0 : i32
    %c0_i32_1 = arith.constant 0 : i32
    return %c0_i32, %c0_i32_0 : i32, i32
  }
  func.func @transform_16(%arg0: i32) -> (i32, i32) {
    %c0_i32 = arith.constant 0 : i32
    %c0_i32_0 = arith.constant 0 : i32
    %c0_i32_1 = arith.constant 0 : i32
    return %c0_i32, %c0_i32_0 : i32, i32
  }
  func.func @transform_17(%arg0: i32) -> (i32, i32) {
    %c0_i32 = arith.constant 0 : i32
    %c0_i32_0 = arith.constant 0 : i32
    %c0_i32_1 = arith.constant 0 : i32
    return %c0_i32, %c0_i32_0 : i32, i32
  }
  func.func @transform_18(%arg0: i32) -> (i32, i32) {
    %c0_i32 = arith.constant 0 : i32
    %c0_i32_0 = arith.constant 0 : i32
    %c0_i32_1 = arith.constant 0 : i32
    return %c0_i32, %c0_i32_0 : i32, i32
  }
  func.func @transform_19(%arg0: i32) -> (i32, i32) {
    %c0_i32 = arith.constant 0 : i32
    %c0_i32_0 = arith.constant 0 : i32
    %c0_i32_1 = arith.constant 0 : i32
    return %c0_i32, %c0_i32_0 : i32, i32
  }
  func.func @transform_20(%arg0: i32) -> (i32, i32, i32) {
    %c0_i32 = arith.constant 0 : i32
    %c0_i32_0 = arith.constant 0 : i32
    %c0_i32_1 = arith.constant 0 : i32
    return %arg0, %c0_i32, %c0_i32_0 : i32, i32, i32
  }
  func.func @transform_21(%arg0: i32) -> (i32, i32, i32) {
    %c0_i32 = arith.constant 0 : i32
    %c0_i32_0 = arith.constant 0 : i32
    %c0_i32_1 = arith.constant 0 : i32
    return %arg0, %c0_i32, %c0_i32_0 : i32, i32, i32
  }
}

</mosaic_0001>

<llo_original>
// kernel: tpu_custom_call.1
$region0: #{tpu_custom_call.1}
  #allocation0 [shape = 'u32[]', space=smem, size = 0x4, offset = 0x4, fixed_abs, tag = 'smem constant byte address 0x4 - core index']
  #allocation1 [shape = 'u32[144,128]{1,0:T(1,128)}', space=vmem, size = 0x12000, scoped, tag = 'internal scratch']
  %s0 = inlined_call_operand.vmem [shape: f32[2,16,32], index: 0, kind: input, shape index: {}]
  %s1 = inlined_call_operand.hbm [shape: f32[2,16,32], index: 1, kind: input, shape index: {}]
  %s2 = inlined_call_operand.hbm [shape: f32[16,32], index: 2, kind: input, shape index: {}]
  %s3 = inlined_call_operand.hbm [shape: f32[32,32], index: 3, kind: input, shape index: {}]
  %s4 = inlined_call_operand.hbm [shape: f32[1,32], index: 4, kind: input, shape index: {}]
  %s5 = inlined_call_operand.hbm [shape: f32[1,32], index: 5, kind: input, shape index: {}]
  %s6 = inlined_call_operand.hbm [shape: bf16[32,32], index: 6, kind: input, shape index: {}]
  %s7 = inlined_call_operand.hbm [shape: bf16[32,32], index: 7, kind: input, shape index: {}]
  %s8 = inlined_call_operand.hbm [shape: bf16[32,32], index: 8, kind: input, shape index: {}]
  %s9 = inlined_call_operand.hbm [shape: bf16[32,32], index: 9, kind: input, shape index: {}]
  %s10 = inlined_call_operand.vmem [shape: f32[1,32], index: 10, kind: input, shape index: {}]
  %s11 = inlined_call_operand.vmem [shape: f32[1,32], index: 11, kind: input, shape index: {}]
  %s12 = inlined_call_operand.vmem [shape: f32[1,32], index: 12, kind: input, shape index: {}]
  %s13 = inlined_call_operand.hbm [shape: bf16[32,64], index: 13, kind: input, shape index: {}]
  %s14 = inlined_call_operand.vmem [shape: f32[1,64], index: 14, kind: input, shape index: {}]
  %s15 = inlined_call_operand.vmem [shape: bf16[64,64], index: 15, kind: input, shape index: {}]
  %s16 = inlined_call_operand.vmem [shape: f32[1,64], index: 16, kind: input, shape index: {}]
  %s17 = inlined_call_operand.vmem [shape: bf16[64,32], index: 17, kind: input, shape index: {}]
  %s18 = inlined_call_operand.vmem [shape: f32[1,32], index: 18, kind: input, shape index: {}]
  %s19 = inlined_call_operand.vmem [shape: f32[1,32], index: 19, kind: input, shape index: {}]
  %s20 = inlined_call_operand.hbm [shape: f32[2,16,32], index: 20, kind: output, shape index: {0}]
  %s21 = inlined_call_operand.hbm [shape: f32[2,16,32], index: 21, kind: output, shape index: {1}]
  %22 = xla_tuple %s20, %s21
  %s23 = sld [smem:[#allocation0]]
  $region161: #{tpu_custom_call.1} parent=0
    _
  %s25 = ssub.s32 1, %s23
  %s26 = scalar_select 0, %s25, %s23
  $region1: #{tpu_custom_call.1} parent=0
    #allocation2 [shape = 'u8[16384]{0}', space=vmem, size = 0x4000, scoped, tag = 'input window, operand 1']
    #allocation3 [shape = 's32[2]{0}', space=sflag, size = 0x8, scoped, tag = 'scoped memory for tpu_custom_call.1']
    #allocation4 [shape = 's32[2]{0}', space=sflag, size = 0x8, scoped, tag = 'scoped memory for tpu_custom_call.1']
    #allocation5 [shape = 'u8[8192]{0}', space=vmem, size = 0x2000, scoped, tag = 'input window, operand 2, single buffered']
    #allocation6 [shape = 's32[1]{0}', space=sflag, size = 0x4, scoped, tag = 'scoped memory for tpu_custom_call.1']
    #allocation7 [shape = 'u8[16384]{0}', space=vmem, size = 0x4000, scoped, tag = 'input window, operand 3, single buffered']
    #allocation8 [shape = 'u8[512]{0}', space=vmem, size = 0x400, scoped, tag = 'input window, operand 4, single buffered']
    #allocation9 [shape = 's32[1]{0}', space=sflag, size = 0x4, scoped, tag = 'scoped memory for tpu_custom_call.1']
    #allocation10 [shape = 'u8[512]{0}', space=vmem, size = 0x400, scoped, tag = 'input window, operand 5, single buffered']
    #allocation11 [shape = 'u8[8192]{0}', space=vmem, size = 0x2000, scoped, tag = 'input window, operand 6, single buffered']
    #allocation12 [shape = 's32[1]{0}', space=sflag, size = 0x4, scoped, tag = 'scoped memory for tpu_custom_call.1']
    #allocation13 [shape = 'u8[8192]{0}', space=vmem, size = 0x2000, scoped, tag = 'input window, operand 7, single buffered']
    #allocation14 [shape = 'u8[8192]{0}', space=vmem, size = 0x2000, scoped, tag = 'input window, operand 8, single buffered']
    #allocation15 [shape = 's32[1]{0}', space=sflag, size = 0x4, scoped, tag = 'scoped memory for tpu_custom_call.1']
    #allocation16 [shape = 'u8[8192]{0}', space=vmem, size = 0x2000, scoped, tag = 'input window, operand 9, single buffered']
    #allocation17 [shape = 'u8[8192]{0}', space=vmem, size = 0x2000, scoped, tag = 'input window, operand 13, single buffered']
    #allocation18 [shape = 's32[1]{0}', space=sflag, size = 0x4, scoped, tag = 'scoped memory for tpu_custom_call.1']
    #allocation19 [shape = 'u8[16384]{0}', space=vmem, size = 0x4000, scoped, tag = 'output window, operand 0']
    #allocation20 [shape = 'u8[16384]{0}', space=vmem, size = 0x4000, scoped, tag = 'output window, operand 1']
    #allocation21 [shape = 's32[2]{0}', space=sflag, size = 0x8, scoped, tag = 'scoped memory for tpu_custom_call.1']
    %27 = vsyncpa [#allocation3], 0
    %s28 = scalar_lea.sflag [#allocation3], 1
    %29 = vsyncpa %s28, 0
    %30 = vsyncpa [#allocation6], 0
    %31 = vsyncpa [#allocation9], 0
    %32 = vsyncpa [#allocation12], 0
    %33 = vsyncpa [#allocation15], 0
    %34 = vsyncpa [#allocation18], 0
    %35 = vsyncpa [#allocation4], 0
    %s36 = scalar_lea.sflag [#allocation4], 1
    %37 = vsyncpa %s36, 0
    %38 = vsyncpa [#allocation21], 0
    %s39 = scalar_lea.sflag [#allocation21], 1
    %40 = vsyncpa %s39, 0
    loop: start=0, step=1, limit=4
    $region2: #{tpu_custom_call.1} parent=1 // loop_pre_header
      _
    $region3: #{tpu_custom_call.1} parent=1 // loop_header
      %s42 = sphi 0, %s46
      %p43 = scmp.ge.s32.totalorder %s42, 4
      %s52 = sphi 0, %s54
      %s55 = sphi 0, %s52
      %s56 = sphi 0, %s55
      %s72 = sphi 0, %s56
      %s78 = sphi 0, %s80
      %s81 = sphi 0, %s78
      %s82 = sphi 0, %s81
      %s98 = sphi 0, %s82
      %s102 = sphi 0, %s102
      %s104 = sphi 0, %s102
      %s105 = sphi 0, %s104
      %s119 = sphi 0, %s105
      %s123 = sphi 0, %s123
      %s125 = sphi 0, %s123
      %s126 = sphi 0, %s125
      %s140 = sphi 0, %s126
      %s144 = sphi 0, %s144
      %s146 = sphi 0, %s144
      %s147 = sphi 0, %s146
      %s161 = sphi 0, %s147
      %s165 = sphi 0, %s165
      %s167 = sphi 0, %s165
      %s168 = sphi 0, %s167
      %s182 = sphi 0, %s168
      %s186 = sphi 0, %s186
      %s188 = sphi 0, %s186
      %s189 = sphi 0, %s188
      %s203 = sphi 0, %s189
      %s207 = sphi 0, %s207
      %s209 = sphi 0, %s207
      %s210 = sphi 0, %s209
      %s224 = sphi 0, %s210
      %s228 = sphi 0, %s228
      %s230 = sphi 0, %s228
      %s231 = sphi 0, %s230
      %s245 = sphi 0, %s231
      %s249 = sphi 0, %s249
      %s251 = sphi 0, %s249
      %s252 = sphi 0, %s251
      %s266 = sphi 0, %s252
      %s270 = sphi 0, %s270
      %s272 = sphi 0, %s270
      %s273 = sphi 0, %s272
      %s287 = sphi 0, %s273
      %s291 = sphi 0, %s291
      %s293 = sphi 0, %s291
      %s294 = sphi 0, %s293
      %s308 = sphi 0, %s294
      %s312 = sphi 0, %s312
      %s314 = sphi 0, %s312
      %s315 = sphi 0, %s314
      %s329 = sphi 0, %s315
      %s333 = sphi 0, %s333
      %s335 = sphi 0, %s333
      %s336 = sphi 0, %s335
      %s350 = sphi 0, %s336
      %s354 = sphi 0, %s354
      %s356 = sphi 0, %s354
      %s357 = sphi 0, %s356
      %s371 = sphi 0, %s357
      %s375 = sphi 0, %s375
      %s377 = sphi 0, %s375
      %s378 = sphi 0, %s377
      %s392 = sphi 0, %s378
      %s396 = sphi 0, %s396
      %s398 = sphi 0, %s396
      %s399 = sphi 0, %s398
      %s413 = sphi 0, %s399
      %s417 = sphi 0, %s417
      %s419 = sphi 0, %s417
      %s420 = sphi 0, %s419
      %s434 = sphi 0, %s420
      %s438 = sphi 0, %s438
      %s440 = sphi 0, %s438
      %s441 = sphi 0, %s440
      %s455 = sphi 0, %s441
      %s459 = sphi 0, %s459
      %s461 = sphi 0, %s459
      %s462 = sphi 0, %s461
      %s476 = sphi 0, %s462
      %s482 = sphi 0, %s484
      %s485 = sphi 0, %s482
      %s486 = sphi 0, %s485
      %s502 = sphi 0, %s486
      %s508 = sphi 0, %s510
      %s511 = sphi 0, %s508
      %s512 = sphi 0, %s511
      %s528 = sphi 0, %s512
    $region4: #{tpu_custom_call.1} parent=1 // loop_header_branch
      %45 = sbr.rel (%p43) target = $region8
    $region5: #{tpu_custom_call.1} parent=1 // loop_body
      %s47 = ssub.s32 %s42, 1
      %s48 = ssub.s32 %s42, 2
      %s49 = sadd.s32 %s42, 1
      %s50 = ssub.s32 %s42, %s49
      %p51 = scmp.eq.s32.totalorder %s50, 0
      %s53 = sadd.s32 %s52, 1
      %s54 = scalar_select %p51, %s52, %s53
      %p57 = pneg %p51
      %p58 = scmp.eq.s32.totalorder %s42, 1
      %p59 = por %p57, %p58
      %p60 = scmp.ne.s32.totalorder %s52, %s55
      %p61 = scmp.eq.s32.totalorder %s42, 0
      %p62 = por %p60, %p61
      %p63 = scmp.ne.s32.totalorder %s52, %s55
      %p64 = scmp.eq.s32.totalorder %s47, 1
      %p65 = por %p63, %p64
      %p66 = scmp.ne.s32.totalorder %s55, %s56
      %p67 = scmp.eq.s32.totalorder %s47, 0
      %p68 = por %p66, %p67
      %p69 = scmp.ne.s32.totalorder %s55, %s56
      %p70 = scmp.eq.s32.totalorder %s48, 1
      %p71 = por %p69, %p70
      %p73 = scmp.ne.s32.totalorder %s56, %s72
      %p74 = scmp.eq.s32.totalorder %s48, 0
      %p75 = por %p73, %p74
      %s76 = ssub.s32 %s42, %s49
      %p77 = scmp.eq.s32.totalorder %s76, 0
      %s79 = sadd.s32 %s78, 1
      %s80 = scalar_select %p77, %s78, %s79
      %p83 = pneg %p77
      %p84 = scmp.eq.s32.totalorder %s42, 1
      %p85 = por %p83, %p84
      %p86 = scmp.ne.s32.totalorder %s78, %s81
      %p87 = scmp.eq.s32.totalorder %s42, 0
      %p88 = por %p86, %p87
      %p89 = scmp.ne.s32.totalorder %s78, %s81
      %p90 = scmp.eq.s32.totalorder %s47, 1
      %p91 = por %p89, %p90
      %p92 = scmp.ne.s32.totalorder %s81, %s82
      %p93 = scmp.eq.s32.totalorder %s47, 0
      %p94 = por %p92, %p93
      %p95 = scmp.ne.s32.totalorder %s81, %s82
      %p96 = scmp.eq.s32.totalorder %s48, 1
      %p97 = por %p95, %p96
      %p99 = scmp.ne.s32.totalorder %s82, %s98
      %p100 = scmp.eq.s32.totalorder %s48, 0
      %p101 = por %p99, %p100
      %s103 = sadd.s32 %s102, 1
      %p106 = scmp.eq.s32.totalorder %s42, 1
      %p107 = scmp.ne.s32.totalorder %s102, %s104
      %p108 = scmp.eq.s32.totalorder %s42, 0
      %p109 = por %p107, %p108
      %p110 = scmp.ne.s32.totalorder %s102, %s104
      %p111 = scmp.eq.s32.totalorder %s47, 1
      %p112 = por %p110, %p111
      %p113 = scmp.ne.s32.totalorder %s104, %s105
      %p114 = scmp.eq.s32.totalorder %s47, 0
      %p115 = por %p113, %p114
      %p116 = scmp.ne.s32.totalorder %s104, %s105
      %p117 = scmp.eq.s32.totalorder %s48, 1
      %p118 = por %p116, %p117
      %p120 = scmp.ne.s32.totalorder %s105, %s119
      %p121 = scmp.eq.s32.totalorder %s48, 0
      %p122 = por %p120, %p121
      %s124 = sadd.s32 %s123, 1
      %p127 = scmp.eq.s32.totalorder %s42, 1
      %p128 = scmp.ne.s32.totalorder %s123, %s125
      %p129 = scmp.eq.s32.totalorder %s42, 0
      %p130 = por %p128, %p129
      %p131 = scmp.ne.s32.totalorder %s123, %s125
      %p132 = scmp.eq.s32.totalorder %s47, 1
      %p133 = por %p131, %p132
      %p134 = scmp.ne.s32.totalorder %s125, %s126
      %p135 = scmp.eq.s32.totalorder %s47, 0
      %p136 = por %p134, %p135
      %p137 = scmp.ne.s32.totalorder %s125, %s126
      %p138 = scmp.eq.s32.totalorder %s48, 1
      %p139 = por %p137, %p138
      %p141 = scmp.ne.s32.totalorder %s126, %s140
      %p142 = scmp.eq.s32.totalorder %s48, 0
      %p143 = por %p141, %p142
      %s145 = sadd.s32 %s144, 1
      %p148 = scmp.eq.s32.totalorder %s42, 1
      %p149 = scmp.ne.s32.totalorder %s144, %s146
      %p150 = scmp.eq.s32.totalorder %s42, 0
      %p151 = por %p149, %p150
      %p152 = scmp.ne.s32.totalorder %s144, %s146
      %p153 = scmp.eq.s32.totalorder %s47, 1
      %p154 = por %p152, %p153
      %p155 = scmp.ne.s32.totalorder %s146, %s147
      %p156 = scmp.eq.s32.totalorder %s47, 0
      %p157 = por %p155, %p156
      %p158 = scmp.ne.s32.totalorder %s146, %s147
      %p159 = scmp.eq.s32.totalorder %s48, 1
      %p160 = por %p158, %p159
      %p162 = scmp.ne.s32.totalorder %s147, %s161
      %p163 = scmp.eq.s32.totalorder %s48, 0
      %p164 = por %p162, %p163
      %s166 = sadd.s32 %s165, 1
      %p169 = scmp.eq.s32.totalorder %s42, 1
      %p170 = scmp.ne.s32.totalorder %s165, %s167
      %p171 = scmp.eq.s32.totalorder %s42, 0
      %p172 = por %p170, %p171
      %p173 = scmp.ne.s32.totalorder %s165, %s167
      %p174 = scmp.eq.s32.totalorder %s47, 1
      %p175 = por %p173, %p174
      %p176 = scmp.ne.s32.totalorder %s167, %s168
      %p177 = scmp.eq.s32.totalorder %s47, 0
      %p178 = por %p176, %p177
      %p179 = scmp.ne.s32.totalorder %s167, %s168
      %p180 = scmp.eq.s32.totalorder %s48, 1
      %p181 = por %p179, %p180
      %p183 = scmp.ne.s32.totalorder %s168, %s182
      %p184 = scmp.eq.s32.totalorder %s48, 0
      %p185 = por %p183, %p184
      %s187 = sadd.s32 %s186, 1
      %p190 = scmp.eq.s32.totalorder %s42, 1
      %p191 = scmp.ne.s32.totalorder %s186, %s188
      %p192 = scmp.eq.s32.totalorder %s42, 0
      %p193 = por %p191, %p192
      %p194 = scmp.ne.s32.totalorder %s186, %s188
      %p195 = scmp.eq.s32.totalorder %s47, 1
      %p196 = por %p194, %p195
      %p197 = scmp.ne.s32.totalorder %s188, %s189
      %p198 = scmp.eq.s32.totalorder %s47, 0
      %p199 = por %p197, %p198
      %p200 = scmp.ne.s32.totalorder %s188, %s189
      %p201 = scmp.eq.s32.totalorder %s48, 1
      %p202 = por %p200, %p201
      %p204 = scmp.ne.s32.totalorder %s189, %s203
      %p205 = scmp.eq.s32.totalorder %s48, 0
      %p206 = por %p204, %p205
      %s208 = sadd.s32 %s207, 1
      %p211 = scmp.eq.s32.totalorder %s42, 1
      %p212 = scmp.ne.s32.totalorder %s207, %s209
      %p213 = scmp.eq.s32.totalorder %s42, 0
      %p214 = por %p212, %p213
      %p215 = scmp.ne.s32.totalorder %s207, %s209
      %p216 = scmp.eq.s32.totalorder %s47, 1
      %p217 = por %p215, %p216
      %p218 = scmp.ne.s32.totalorder %s209, %s210
      %p219 = scmp.eq.s32.totalorder %s47, 0
      %p220 = por %p218, %p219
      %p221 = scmp.ne.s32.totalorder %s209, %s210
      %p222 = scmp.eq.s32.totalorder %s48, 1
      %p223 = por %p221, %p222
      %p225 = scmp.ne.s32.totalorder %s210, %s224
      %p226 = scmp.eq.s32.totalorder %s48, 0
      %p227 = por %p225, %p226
      %s229 = sadd.s32 %s228, 1
      %p232 = scmp.eq.s32.totalorder %s42, 1
      %p233 = scmp.ne.s32.totalorder %s228, %s230
      %p234 = scmp.eq.s32.totalorder %s42, 0
      %p235 = por %p233, %p234
      %p236 = scmp.ne.s32.totalorder %s228, %s230
      %p237 = scmp.eq.s32.totalorder %s47, 1
      %p238 = por %p236, %p237
      %p239 = scmp.ne.s32.totalorder %s230, %s231
      %p240 = scmp.eq.s32.totalorder %s47, 0
      %p241 = por %p239, %p240
      %p242 = scmp.ne.s32.totalorder %s230, %s231
      %p243 = scmp.eq.s32.totalorder %s48, 1
      %p244 = por %p242, %p243
      %p246 = scmp.ne.s32.totalorder %s231, %s245
      %p247 = scmp.eq.s32.totalorder %s48, 0
      %p248 = por %p246, %p247
      %s250 = sadd.s32 %s249, 1
      %p253 = scmp.eq.s32.totalorder %s42, 1
      %p254 = scmp.ne.s32.totalorder %s249, %s251
      %p255 = scmp.eq.s32.totalorder %s42, 0
      %p256 = por %p254, %p255
      %p257 = scmp.ne.s32.totalorder %s249, %s251
      %p258 = scmp.eq.s32.totalorder %s47, 1
      %p259 = por %p257, %p258
      %p260 = scmp.ne.s32.totalorder %s251, %s252
      %p261 = scmp.eq.s32.totalorder %s47, 0
      %p262 = por %p260, %p261
      %p263 = scmp.ne.s32.totalorder %s251, %s252
      %p264 = scmp.eq.s32.totalorder %s48, 1
      %p265 = por %p263, %p264
      %p267 = scmp.ne.s32.totalorder %s252, %s266
      %p268 = scmp.eq.s32.totalorder %s48, 0
      %p269 = por %p267, %p268
      %s271 = sadd.s32 %s270, 1
      %p274 = scmp.eq.s32.totalorder %s42, 1
      %p275 = scmp.ne.s32.totalorder %s270, %s272
      %p276 = scmp.eq.s32.totalorder %s42, 0
      %p277 = por %p275, %p276
      %p278 = scmp.ne.s32.totalorder %s270, %s272
      %p279 = scmp.eq.s32.totalorder %s47, 1
      %p280 = por %p278, %p279
      %p281 = scmp.ne.s32.totalorder %s272, %s273
      %p282 = scmp.eq.s32.totalorder %s47, 0
      %p283 = por %p281, %p282
      %p284 = scmp.ne.s32.totalorder %s272, %s273
      %p285 = scmp.eq.s32.totalorder %s48, 1
      %p286 = por %p284, %p285
      %p288 = scmp.ne.s32.totalorder %s273, %s287
      %p289 = scmp.eq.s32.totalorder %s48, 0
      %p290 = por %p288, %p289
      %s292 = sadd.s32 %s291, 1
      %p295 = scmp.eq.s32.totalorder %s42, 1
      %p296 = scmp.ne.s32.totalorder %s291, %s293
      %p297 = scmp.eq.s32.totalorder %s42, 0
      %p298 = por %p296, %p297
      %p299 = scmp.ne.s32.totalorder %s291, %s293
      %p300 = scmp.eq.s32.totalorder %s47, 1
      %p301 = por %p299, %p300
      %p302 = scmp.ne.s32.totalorder %s293, %s294
      %p303 = scmp.eq.s32.totalorder %s47, 0
      %p304 = por %p302, %p303
      %p305 = scmp.ne.s32.totalorder %s293, %s294
      %p306 = scmp.eq.s32.totalorder %s48, 1
      %p307 = por %p305, %p306
      %p309 = scmp.ne.s32.totalorder %s294, %s308
      %p310 = scmp.eq.s32.totalorder %s48, 0
      %p311 = por %p309, %p310
      %s313 = sadd.s32 %s312, 1
      %p316 = scmp.eq.s32.totalorder %s42, 1
      %p317 = scmp.ne.s32.totalorder %s312, %s314
      %p318 = scmp.eq.s32.totalorder %s42, 0
      %p319 = por %p317, %p318
      %p320 = scmp.ne.s32.totalorder %s312, %s314
      %p321 = scmp.eq.s32.totalorder %s47, 1
      %p322 = por %p320, %p321
      %p323 = scmp.ne.s32.totalorder %s314, %s315
      %p324 = scmp.eq.s32.totalorder %s47, 0
      %p325 = por %p323, %p324
      %p326 = scmp.ne.s32.totalorder %s314, %s315
      %p327 = scmp.eq.s32.totalorder %s48, 1
      %p328 = por %p326, %p327
      %p330 = scmp.ne.s32.totalorder %s315, %s329
      %p331 = scmp.eq.s32.totalorder %s48, 0
      %p332 = por %p330, %p331
      %s334 = sadd.s32 %s333, 1
      %p337 = scmp.eq.s32.totalorder %s42, 1
      %p338 = scmp.ne.s32.totalorder %s333, %s335
      %p339 = scmp.eq.s32.totalorder %s42, 0
      %p340 = por %p338, %p339
      %p341 = scmp.ne.s32.totalorder %s333, %s335
      %p342 = scmp.eq.s32.totalorder %s47, 1
      %p343 = por %p341, %p342
      %p344 = scmp.ne.s32.totalorder %s335, %s336
      %p345 = scmp.eq.s32.totalorder %s47, 0
      %p346 = por %p344, %p345
      %p347 = scmp.ne.s32.totalorder %s335, %s336
      %p348 = scmp.eq.s32.totalorder %s48, 1
      %p349 = por %p347, %p348
      %p351 = scmp.ne.s32.totalorder %s336, %s350
      %p352 = scmp.eq.s32.totalorder %s48, 0
      %p353 = por %p351, %p352
      %s355 = sadd.s32 %s354, 1
      %p358 = scmp.eq.s32.totalorder %s42, 1
      %p359 = scmp.ne.s32.totalorder %s354, %s356
      %p360 = scmp.eq.s32.totalorder %s42, 0
      %p361 = por %p359, %p360
      %p362 = scmp.ne.s32.totalorder %s354, %s356
      %p363 = scmp.eq.s32.totalorder %s47, 1
      %p364 = por %p362, %p363
      %p365 = scmp.ne.s32.totalorder %s356, %s357
      %p366 = scmp.eq.s32.totalorder %s47, 0
      %p367 = por %p365, %p366
      %p368 = scmp.ne.s32.totalorder %s356, %s357
      %p369 = scmp.eq.s32.totalorder %s48, 1
      %p370 = por %p368, %p369
      %p372 = scmp.ne.s32.totalorder %s357, %s371
      %p373 = scmp.eq.s32.totalorder %s48, 0
      %p374 = por %p372, %p373
      %s376 = sadd.s32 %s375, 1
      %p379 = scmp.eq.s32.totalorder %s42, 1
      %p380 = scmp.ne.s32.totalorder %s375, %s377
      %p381 = scmp.eq.s32.totalorder %s42, 0
      %p382 = por %p380, %p381
      %p383 = scmp.ne.s32.totalorder %s375, %s377
      %p384 = scmp.eq.s32.totalorder %s47, 1
      %p385 = por %p383, %p384
      %p386 = scmp.ne.s32.totalorder %s377, %s378
      %p387 = scmp.eq.s32.totalorder %s47, 0
      %p388 = por %p386, %p387
      %p389 = scmp.ne.s32.totalorder %s377, %s378
      %p390 = scmp.eq.s32.totalorder %s48, 1
      %p391 = por %p389, %p390
      %p393 = scmp.ne.s32.totalorder %s378, %s392
      %p394 = scmp.eq.s32.totalorder %s48, 0
      %p395 = por %p393, %p394
      %s397 = sadd.s32 %s396, 1
      %p400 = scmp.eq.s32.totalorder %s42, 1
      %p401 = scmp.ne.s32.totalorder %s396, %s398
      %p402 = scmp.eq.s32.totalorder %s42, 0
      %p403 = por %p401, %p402
      %p404 = scmp.ne.s32.totalorder %s396, %s398
      %p405 = scmp.eq.s32.totalorder %s47, 1
      %p406 = por %p404, %p405
      %p407 = scmp.ne.s32.totalorder %s398, %s399
      %p408 = scmp.eq.s32.totalorder %s47, 0
      %p409 = por %p407, %p408
      %p410 = scmp.ne.s32.totalorder %s398, %s399
      %p411 = scmp.eq.s32.totalorder %s48, 1
      %p412 = por %p410, %p411
      %p414 = scmp.ne.s32.totalorder %s399, %s413
      %p415 = scmp.eq.s32.totalorder %s48, 0
      %p416 = por %p414, %p415
      %s418 = sadd.s32 %s417, 1
      %p421 = scmp.eq.s32.totalorder %s42, 1
      %p422 = scmp.ne.s32.totalorder %s417, %s419
      %p423 = scmp.eq.s32.totalorder %s42, 0
      %p424 = por %p422, %p423
      %p425 = scmp.ne.s32.totalorder %s417, %s419
      %p426 = scmp.eq.s32.totalorder %s47, 1
      %p427 = por %p425, %p426
      %p428 = scmp.ne.s32.totalorder %s419, %s420
      %p429 = scmp.eq.s32.totalorder %s47, 0
      %p430 = por %p428, %p429
      %p431 = scmp.ne.s32.totalorder %s419, %s420
      %p432 = scmp.eq.s32.totalorder %s48, 1
      %p433 = por %p431, %p432
      %p435 = scmp.ne.s32.totalorder %s420, %s434
      %p436 = scmp.eq.s32.totalorder %s48, 0
      %p437 = por %p435, %p436
      %s439 = sadd.s32 %s438, 1
      %p442 = scmp.eq.s32.totalorder %s42, 1
      %p443 = scmp.ne.s32.totalorder %s438, %s440
      %p444 = scmp.eq.s32.totalorder %s42, 0
      %p445 = por %p443, %p444
      %p446 = scmp.ne.s32.totalorder %s438, %s440
      %p447 = scmp.eq.s32.totalorder %s47, 1
      %p448 = por %p446, %p447
      %p449 = scmp.ne.s32.totalorder %s440, %s441
      %p450 = scmp.eq.s32.totalorder %s47, 0
      %p451 = por %p449, %p450
      %p452 = scmp.ne.s32.totalorder %s440, %s441
      %p453 = scmp.eq.s32.totalorder %s48, 1
      %p454 = por %p452, %p453
      %p456 = scmp.ne.s32.totalorder %s441, %s455
      %p457 = scmp.eq.s32.totalorder %s48, 0
      %p458 = por %p456, %p457
      %s460 = sadd.s32 %s459, 1
      %p463 = scmp.eq.s32.totalorder %s42, 1
      %p464 = scmp.ne.s32.totalorder %s459, %s461
      %p465 = scmp.eq.s32.totalorder %s42, 0
      %p466 = por %p464, %p465
      %p467 = scmp.ne.s32.totalorder %s459, %s461
      %p468 = scmp.eq.s32.totalorder %s47, 1
      %p469 = por %p467, %p468
      %p470 = scmp.ne.s32.totalorder %s461, %s462
      %p471 = scmp.eq.s32.totalorder %s47, 0
      %p472 = por %p470, %p471
      %p473 = scmp.ne.s32.totalorder %s461, %s462
      %p474 = scmp.eq.s32.totalorder %s48, 1
      %p475 = por %p473, %p474
      %p477 = scmp.ne.s32.totalorder %s462, %s476
      %p478 = scmp.eq.s32.totalorder %s48, 0
      %p479 = por %p477, %p478
      %s480 = ssub.s32 %s42, %s49
      %p481 = scmp.eq.s32.totalorder %s480, 0
      %s483 = sadd.s32 %s482, 1
      %s484 = scalar_select %p481, %s482, %s483
      %p487 = pneg %p481
      %p488 = scmp.eq.s32.totalorder %s42, 1
      %p489 = por %p487, %p488
      %p490 = scmp.ne.s32.totalorder %s482, %s485
      %p491 = scmp.eq.s32.totalorder %s42, 0
      %p492 = por %p490, %p491
      %p493 = scmp.ne.s32.totalorder %s482, %s485
      %p494 = scmp.eq.s32.totalorder %s47, 1
      %p495 = por %p493, %p494
      %p496 = scmp.ne.s32.totalorder %s485, %s486
      %p497 = scmp.eq.s32.totalorder %s47, 0
      %p498 = por %p496, %p497
      %p499 = scmp.ne.s32.totalorder %s485, %s486
      %p500 = scmp.eq.s32.totalorder %s48, 1
      %p501 = por %p499, %p500
      %p503 = scmp.ne.s32.totalorder %s486, %s502
      %p504 = scmp.eq.s32.totalorder %s48, 0
      %p505 = por %p503, %p504
      %s506 = ssub.s32 %s42, %s49
      %p507 = scmp.eq.s32.totalorder %s506, 0
      %s509 = sadd.s32 %s508, 1
      %s510 = scalar_select %p507, %s508, %s509
      %p513 = pneg %p507
      %p514 = scmp.eq.s32.totalorder %s42, 1
      %p515 = por %p513, %p514
      %p516 = scmp.ne.s32.totalorder %s508, %s511
      %p517 = scmp.eq.s32.totalorder %s42, 0
      %p518 = por %p516, %p517
      %p519 = scmp.ne.s32.totalorder %s508, %s511
      %p520 = scmp.eq.s32.totalorder %s47, 1
      %p521 = por %p519, %p520
      %p522 = scmp.ne.s32.totalorder %s511, %s512
      %p523 = scmp.eq.s32.totalorder %s47, 0
      %p524 = por %p522, %p523
      %p525 = scmp.ne.s32.totalorder %s511, %s512
      %p526 = scmp.eq.s32.totalorder %s48, 1
      %p527 = por %p525, %p526
      %p529 = scmp.ne.s32.totalorder %s512, %s528
      %p530 = scmp.eq.s32.totalorder %s48, 0
      %p531 = por %p529, %p530
      %p532 = scmp.le.s32.totalorder 1, %s42
      %p533 = scmp.lt.s32.totalorder %s42, 3
      %p534 = pnand %p532, %p533
      %p535 = pneg %p534
      // Predicated region
      $region9: #{tpu_custom_call.1} parent=5 // pred_check
        _
      $region10: #{tpu_custom_call.1} parent=5 // pred_check_branch
        %537 = sbr.rel (%p534) target = $region12
      $region11: #{tpu_custom_call.1} parent=5 // pred_region
        %s538 = ssub.s32 %s42, 1
        // Predicated region
        $region13: #{tpu_custom_call.1} parent=11 // pred_check
          %p539 = pneg %p115
        $region14: #{tpu_custom_call.1} parent=11 // pred_check_branch
          %541 = sbr.rel (%p539) target = $region16
        $region15: #{tpu_custom_call.1} parent=11 // pred_region
          %s543 = ssub.s32 256, 256
          %544 = vsyncadd [#allocation6], %s543
          %s545 = sshll.u32 [#allocation5], 4
          %s546 = int_to_ptr.vmem [resolvable:$true] %s545
          %551 = dma.hbm_to_vmem [thread:$0]  %s2, 256, %s546, [#allocation6], 128, 128, 8
        $region16: #{tpu_custom_call.1} parent=11 // pred_fallthru
          _
        // Predicated region
        $region17: #{tpu_custom_call.1} parent=11 // pred_check
          %p552 = pneg %p136
        $region18: #{tpu_custom_call.1} parent=11 // pred_check_branch
          %554 = sbr.rel (%p552) target = $region20
        $region19: #{tpu_custom_call.1} parent=11 // pred_region
          %s556 = ssub.s32 512, 512
          %557 = vsyncadd [#allocation6], %s556
          %s558 = sshll.u32 [#allocation7], 4
          %s559 = int_to_ptr.vmem [resolvable:$true] %s558
          %564 = dma.hbm_to_vmem [thread:$0]  %s3, 512, %s559, [#allocation6], 128, 128, 8
        $region20: #{tpu_custom_call.1} parent=11 // pred_fallthru
          _
        // Predicated region
        $region21: #{tpu_custom_call.1} parent=11 // pred_check
          %p565 = pneg %p157
        $region22: #{tpu_custom_call.1} parent=11 // pred_check_branch
          %567 = sbr.rel (%p565) target = $region24
        $region23: #{tpu_custom_call.1} parent=11 // pred_region
          %s569 = ssub.s32 16, 16
          %570 = vsyncadd [#allocation9], %s569
          %s572 = sshll.u32 [#allocation8], 4
          %s573 = int_to_ptr.vmem [resolvable:$true] %s572
          %575 = dma.hbm_to_vmem [thread:$0]  %s4, 16, %s573, [#allocation9]
        $region24: #{tpu_custom_call.1} parent=11 // pred_fallthru
          _
        // Predicated region
        $region25: #{tpu_custom_call.1} parent=11 // pred_check
          %p576 = pneg %p178
        $region26: #{tpu_custom_call.1} parent=11 // pred_check_branch
          %578 = sbr.rel (%p576) target = $region28
        $region27: #{tpu_custom_call.1} parent=11 // pred_region
          %s580 = ssub.s32 16, 16
          %581 = vsyncadd [#allocation9], %s580
          %s583 = sshll.u32 [#allocation10], 4
          %s584 = int_to_ptr.vmem [resolvable:$true] %s583
          %586 = dma.hbm_to_vmem [thread:$0]  %s5, 16, %s584, [#allocation9]
        $region28: #{tpu_custom_call.1} parent=11 // pred_fallthru
          _
        // Predicated region
        $region29: #{tpu_custom_call.1} parent=11 // pred_check
          %p587 = pneg %p199
        $region30: #{tpu_custom_call.1} parent=11 // pred_check_branch
          %589 = sbr.rel (%p587) target = $region32
        $region31: #{tpu_custom_call.1} parent=11 // pred_region
          %s591 = ssub.s32 256, 256
          %592 = vsyncadd [#allocation12], %s591
          %s593 = sshll.u32 [#allocation11], 4
          %s594 = int_to_ptr.vmem [resolvable:$true] %s593
          %599 = dma.hbm_to_vmem [thread:$0]  %s6, 256, %s594, [#allocation12], 64, 64, 4
        $region32: #{tpu_custom_call.1} parent=11 // pred_fallthru
          _
        // Predicated region
        $region33: #{tpu_custom_call.1} parent=11 // pred_check
          %p600 = pneg %p220
        $region34: #{tpu_custom_call.1} parent=11 // pred_check_branch
          %602 = sbr.rel (%p600) target = $region36
        $region35: #{tpu_custom_call.1} parent=11 // pred_region
          %s604 = ssub.s32 256, 256
          %605 = vsyncadd [#allocation12], %s604
          %s606 = sshll.u32 [#allocation13], 4
          %s607 = int_to_ptr.vmem [resolvable:$true] %s606
          %612 = dma.hbm_to_vmem [thread:$0]  %s7, 256, %s607, [#allocation12], 64, 64, 4
        $region36: #{tpu_custom_call.1} parent=11 // pred_fallthru
          _
        // Predicated region
        $region37: #{tpu_custom_call.1} parent=11 // pred_check
          %p613 = pneg %p241
        $region38: #{tpu_custom_call.1} parent=11 // pred_check_branch
          %615 = sbr.rel (%p613) target = $region40
        $region39: #{tpu_custom_call.1} parent=11 // pred_region
          %s617 = ssub.s32 256, 256
          %618 = vsyncadd [#allocation15], %s617
          %s619 = sshll.u32 [#allocation14], 4
          %s620 = int_to_ptr.vmem [resolvable:$true] %s619
          %625 = dma.hbm_to_vmem [thread:$0]  %s8, 256, %s620, [#allocation15], 64, 64, 4
        $region40: #{tpu_custom_call.1} parent=11 // pred_fallthru
          _
        // Predicated region
        $region41: #{tpu_custom_call.1} parent=11 // pred_check
          %p626 = pneg %p262
        $region42: #{tpu_custom_call.1} parent=11 // pred_check_branch
          %628 = sbr.rel (%p626) target = $region44
        $region43: #{tpu_custom_call.1} parent=11 // pred_region
          %s630 = ssub.s32 256, 256
          %631 = vsyncadd [#allocation15], %s630
          %s632 = sshll.u32 [#allocation16], 4
          %s633 = int_to_ptr.vmem [resolvable:$true] %s632
          %638 = dma.hbm_to_vmem [thread:$0]  %s9, 256, %s633, [#allocation15], 64, 64, 4
        $region44: #{tpu_custom_call.1} parent=11 // pred_fallthru
          _
        // Predicated region
        $region45: #{tpu_custom_call.1} parent=11 // pred_check
          %p639 = pneg %p283
        $region46: #{tpu_custom_call.1} parent=11 // pred_check_branch
          %641 = sbr.rel (%p639) target = $region48
        $region47: #{tpu_custom_call.1} parent=11 // pred_region
          _
        $region48: #{tpu_custom_call.1} parent=11 // pred_fallthru
          _
        // Predicated region
        $region49: #{tpu_custom_call.1} parent=11 // pred_check
          %p642 = pneg %p304
        $region50: #{tpu_custom_call.1} parent=11 // pred_check_branch
          %644 = sbr.rel (%p642) target = $region52
        $region51: #{tpu_custom_call.1} parent=11 // pred_region
          _
        $region52: #{tpu_custom_call.1} parent=11 // pred_fallthru
          _
        // Predicated region
        $region53: #{tpu_custom_call.1} parent=11 // pred_check
          %p645 = pneg %p325
        $region54: #{tpu_custom_call.1} parent=11 // pred_check_branch
          %647 = sbr.rel (%p645) target = $region56
        $region55: #{tpu_custom_call.1} parent=11 // pred_region
          _
        $region56: #{tpu_custom_call.1} parent=11 // pred_fallthru
          _
        // Predicated region
        $region57: #{tpu_custom_call.1} parent=11 // pred_check
          %p648 = pneg %p346
        $region58: #{tpu_custom_call.1} parent=11 // pred_check_branch
          %650 = sbr.rel (%p648) target = $region60
        $region59: #{tpu_custom_call.1} parent=11 // pred_region
          %s652 = ssub.s32 256, 256
          %653 = vsyncadd [#allocation18], %s652
          %s654 = sshll.u32 [#allocation17], 4
          %s655 = int_to_ptr.vmem [resolvable:$true] %s654
          %660 = dma.hbm_to_vmem [thread:$0]  %s13, 256, %s655, [#allocation18], 64, 64, 4
        $region60: #{tpu_custom_call.1} parent=11 // pred_fallthru
          _
        // Predicated region
        $region61: #{tpu_custom_call.1} parent=11 // pred_check
          %p661 = pneg %p367
        $region62: #{tpu_custom_call.1} parent=11 // pred_check_branch
          %663 = sbr.rel (%p661) target = $region64
        $region63: #{tpu_custom_call.1} parent=11 // pred_region
          _
        $region64: #{tpu_custom_call.1} parent=11 // pred_fallthru
          _
        // Predicated region
        $region65: #{tpu_custom_call.1} parent=11 // pred_check
          %p664 = pneg %p388
        $region66: #{tpu_custom_call.1} parent=11 // pred_check_branch
          %666 = sbr.rel (%p664) target = $region68
        $region67: #{tpu_custom_call.1} parent=11 // pred_region
          _
        $region68: #{tpu_custom_call.1} parent=11 // pred_fallthru
          _
        // Predicated region
        $region69: #{tpu_custom_call.1} parent=11 // pred_check
          %p667 = pneg %p409
        $region70: #{tpu_custom_call.1} parent=11 // pred_check_branch
          %669 = sbr.rel (%p667) target = $region72
        $region71: #{tpu_custom_call.1} parent=11 // pred_region
          _
        $region72: #{tpu_custom_call.1} parent=11 // pred_fallthru
          _
        // Predicated region
        $region73: #{tpu_custom_call.1} parent=11 // pred_check
          %p670 = pneg %p430
        $region74: #{tpu_custom_call.1} parent=11 // pred_check_branch
          %672 = sbr.rel (%p670) target = $region76
        $region75: #{tpu_custom_call.1} parent=11 // pred_region
          _
        $region76: #{tpu_custom_call.1} parent=11 // pred_fallthru
          _
        // Predicated region
        $region77: #{tpu_custom_call.1} parent=11 // pred_check
          %p673 = pneg %p451
        $region78: #{tpu_custom_call.1} parent=11 // pred_check_branch
          %675 = sbr.rel (%p673) target = $region80
        $region79: #{tpu_custom_call.1} parent=11 // pred_region
          _
        $region80: #{tpu_custom_call.1} parent=11 // pred_fallthru
          _
        // Predicated region
        $region81: #{tpu_custom_call.1} parent=11 // pred_check
          %p676 = pneg %p472
        $region82: #{tpu_custom_call.1} parent=11 // pred_check_branch
          %678 = sbr.rel (%p676) target = $region84
        $region83: #{tpu_custom_call.1} parent=11 // pred_region
          _
        $region84: #{tpu_custom_call.1} parent=11 // pred_fallthru
          _
      $region12: #{tpu_custom_call.1} parent=5 // pred_fallthru
        _
      %p679 = scmp.lt.s32.totalorder %s42, 2
      // Predicated region
      $region85: #{tpu_custom_call.1} parent=5 // pred_check
        %p680 = pneg %p679
      $region86: #{tpu_custom_call.1} parent=5 // pred_check_branch
        %682 = sbr.rel (%p680) target = $region88
      $region87: #{tpu_custom_call.1} parent=5 // pred_region
        // Predicated region
        $region89: #{tpu_custom_call.1} parent=87 // pred_check
          %p683 = pneg %p62
        $region90: #{tpu_custom_call.1} parent=87 // pred_check_branch
          %685 = sbr.rel (%p683) target = $region92
        $region91: #{tpu_custom_call.1} parent=87 // pred_region
          %p686 = scmp.lt.s32.totalorder %s42, 1
          %s687 = scalar_select %p686, %s42, 1
          %s688 = smul.addr %s687, 2
          %s689 = smul.addr %s688, 8
          %s690 = scalar_lea.vmem %s0, %s689
        $region92: #{tpu_custom_call.1} parent=87 // pred_fallthru
          _
        // Predicated region
        $region93: #{tpu_custom_call.1} parent=87 // pred_check
          %p691 = pneg %p88
        $region94: #{tpu_custom_call.1} parent=87 // pred_check_branch
          %693 = sbr.rel (%p691) target = $region96
        $region95: #{tpu_custom_call.1} parent=87 // pred_region
          %s694 = sand.u32 %s78, 1
          %s695 = scalar_lea.sflag [#allocation3], %s694
          %s696 = sand.u32 %s78, 1
          %s697 = smul.addr %s696, 16
          %s698 = scalar_lea.vmem [#allocation2], %s697
          %s700 = ssub.s32 256, 256
          %701 = vsyncadd %s695, %s700
          %s702 = smul.addr %s42, 2
          %s703 = smul.addr %s702, 128
          %s704 = scalar_lea.hbm %s1, %s703
          %s705 = sshll.u32 %s698, 4
          %s706 = int_to_ptr.vmem [resolvable:$true] %s705
          %711 = dma.hbm_to_vmem [thread:$0]  %s704, 256, %s706, %s695, 128, 128, 8
        $region96: #{tpu_custom_call.1} parent=87 // pred_fallthru
          _
      $region88: #{tpu_custom_call.1} parent=5 // pred_fallthru
        _
      %p712 = scmp.le.s32.totalorder 1, %s42
      %p713 = scmp.lt.s32.totalorder %s42, 3
      %p714 = pnand %p712, %p713
      %p715 = pneg %p714
      // Predicated region
      $region97: #{tpu_custom_call.1} parent=5 // pred_check
        _
      $region98: #{tpu_custom_call.1} parent=5 // pred_check_branch
        %717 = sbr.rel (%p714) target = $region100
      $region99: #{tpu_custom_call.1} parent=5 // pred_region
        %s718 = ssub.s32 %s42, 1
        %s719 = sand.u32 %s81, 1
        %s720 = scalar_lea.sflag [#allocation3], %s719
        %s721 = sand.u32 %s81, 1
        %s722 = smul.addr %s721, 16
        %s723 = scalar_lea.vmem [#allocation2], %s722
        // Predicated region
        $region101: #{tpu_custom_call.1} parent=99 // pred_check
          %p724 = pneg %p94
        $region102: #{tpu_custom_call.1} parent=99 // pred_check_branch
          %726 = sbr.rel (%p724) target = $region104
        $region103: #{tpu_custom_call.1} parent=99 // pred_region
          %727 = dma.done %s720, 256
        $region104: #{tpu_custom_call.1} parent=99 // pred_fallthru
          _
        // Predicated region
        $region105: #{tpu_custom_call.1} parent=99 // pred_check
          %p728 = pneg %p115
        $region106: #{tpu_custom_call.1} parent=99 // pred_check_branch
          %730 = sbr.rel (%p728) target = $region108
        $region107: #{tpu_custom_call.1} parent=99 // pred_region
          %731 = dma.done [#allocation6], 256
        $region108: #{tpu_custom_call.1} parent=99 // pred_fallthru
          _
        // Predicated region
        $region109: #{tpu_custom_call.1} parent=99 // pred_check
          %p732 = pneg %p136
        $region110: #{tpu_custom_call.1} parent=99 // pred_check_branch
          %734 = sbr.rel (%p732) target = $region112
        $region111: #{tpu_custom_call.1} parent=99 // pred_region
          %735 = dma.done [#allocation6], 512
        $region112: #{tpu_custom_call.1} parent=99 // pred_fallthru
          _
        // Predicated region
        $region113: #{tpu_custom_call.1} parent=99 // pred_check
          %p736 = pneg %p157
        $region114: #{tpu_custom_call.1} parent=99 // pred_check_branch
          %738 = sbr.rel (%p736) target = $region116
        $region115: #{tpu_custom_call.1} parent=99 // pred_region
          %739 = dma.done [#allocation9], 16
        $region116: #{tpu_custom_call.1} parent=99 // pred_fallthru
          _
        // Predicated region
        $region117: #{tpu_custom_call.1} parent=99 // pred_check
          %p740 = pneg %p178
        $region118: #{tpu_custom_call.1} parent=99 // pred_check_branch
          %742 = sbr.rel (%p740) target = $region120
        $region119: #{tpu_custom_call.1} parent=99 // pred_region
          %743 = dma.done [#allocation9], 16
        $region120: #{tpu_custom_call.1} parent=99 // pred_fallthru
          _
        // Predicated region
        $region121: #{tpu_custom_call.1} parent=99 // pred_check
          %p744 = pneg %p199
        $region122: #{tpu_custom_call.1} parent=99 // pred_check_branch
          %746 = sbr.rel (%p744) target = $region124
        $region123: #{tpu_custom_call.1} parent=99 // pred_region
          %747 = dma.done [#allocation12], 256
        $region124: #{tpu_custom_call.1} parent=99 // pred_fallthru
          _
        // Predicated region
        $region125: #{tpu_custom_call.1} parent=99 // pred_check
          %p748 = pneg %p220
        $region126: #{tpu_custom_call.1} parent=99 // pred_check_branch
          %750 = sbr.rel (%p748) target = $region128
        $region127: #{tpu_custom_call.1} parent=99 // pred_region
          %751 = dma.done [#allocation12], 256
        $region128: #{tpu_custom_call.1} parent=99 // pred_fallthru
          _
        // Predicated region
        $region129: #{tpu_custom_call.1} parent=99 // pred_check
          %p752 = pneg %p241
        $region130: #{tpu_custom_call.1} parent=99 // pred_check_branch
          %754 = sbr.rel (%p752) target = $region132
        $region131: #{tpu_custom_call.1} parent=99 // pred_region
          %755 = dma.done [#allocation15], 256
        $region132: #{tpu_custom_call.1} parent=99 // pred_fallthru
          _
        // Predicated region
        $region133: #{tpu_custom_call.1} parent=99 // pred_check
          %p756 = pneg %p262
        $region134: #{tpu_custom_call.1} parent=99 // pred_check_branch
          %758 = sbr.rel (%p756) target = $region136
        $region135: #{tpu_custom_call.1} parent=99 // pred_region
          %759 = dma.done [#allocation15], 256
        $region136: #{tpu_custom_call.1} parent=99 // pred_fallthru
          _
        // Predicated region
        $region137: #{tpu_custom_call.1} parent=99 // pred_check
          %p760 = pneg %p346
        $region138: #{tpu_custom_call.1} parent=99 // pred_check_branch
          %762 = sbr.rel (%p760) target = $region140
        $region139: #{tpu_custom_call.1} parent=99 // pred_region
          %763 = dma.done [#allocation18], 256
        $region140: #{tpu_custom_call.1} parent=99 // pred_fallthru
          _
        %p764 = scmp.lt.s32.totalorder %s47, 1
        %s765 = scalar_select %p764, %s47, 1
        %s766 = smul.addr %s765, 2
        %s767 = smul.addr %s766, 8
        %s768 = scalar_lea.vmem %s0, %s767
        %p769 = pneg %p68
        %p770 = pneg %p65
        %s771 = sand.u32 %s81, 1
        %s772 = scalar_lea.sflag [#allocation3], %s771
        %s773 = sand.u32 %s81, 1
        %s774 = smul.addr %s773, 16
        %s775 = scalar_lea.vmem [#allocation2], %s774
        %p776 = pneg %p94
        %p777 = pneg %p91
        %p778 = pneg %p115
        %p779 = pneg %p112
        %p780 = pneg %p136
        %p781 = pneg %p133
        %p782 = pneg %p157
        %p783 = pneg %p154
        %p784 = pneg %p178
        %p785 = pneg %p175
        %p786 = pneg %p199
        %p787 = pneg %p196
        %p788 = pneg %p220
        %p789 = pneg %p217
        %p790 = pneg %p241
        %p791 = pneg %p238
        %p792 = pneg %p262
        %p793 = pneg %p259
        %p794 = pneg %p283
        %p795 = pneg %p280
        %p796 = pneg %p304
        %p797 = pneg %p301
        %p798 = pneg %p325
        %p799 = pneg %p322
        %p800 = pneg %p346
        %p801 = pneg %p343
        %p802 = pneg %p367
        %p803 = pneg %p364
        %p804 = pneg %p388
        %p805 = pneg %p385
        %p806 = pneg %p409
        %p807 = pneg %p406
        %p808 = pneg %p430
        %p809 = pneg %p427
        %p810 = pneg %p451
        %p811 = pneg %p448
        %p812 = pneg %p472
        %p813 = pneg %p469
        %p814 = pneg %p498
        %p815 = pneg %p495
        %s816 = sand.u32 %s485, 1
        %s817 = scalar_lea.sflag [#allocation4], %s816
        %s818 = sand.u32 %s485, 1
        %s819 = smul.addr %s818, 16
        %s820 = scalar_lea.vmem [#allocation19], %s819
        %p821 = pneg %p524
        %p822 = pneg %p521
        %s823 = sand.u32 %s511, 1
        %s824 = scalar_lea.sflag [#allocation21], %s823
        %s825 = sand.u32 %s511, 1
        %s826 = smul.addr %s825, 16
        %s827 = scalar_lea.vmem [#allocation20], %s826
        %p828 = scmp.lt.s32.totalorder %s47, 1
        %s829 = scalar_select %p828, %s47, 1
        %s830 = smul.addr %s829, 2
        %s831 = smul.addr %s830, 8
        %s832 = scalar_lea.vmem %s0, %s831
        %v834 = vld [vmem:[%s832] sm:$0xff]
        %v835 = vld [vmem:[%s832 + $0x8] sm:$0xff]
        %v836 = vld [vmem:[%s723] sm:$0xff]
        %v837 = vld [vmem:[%s723 + $0x8] sm:$0xff]
        %v838 = vld [vmem:[#allocation8] sm:$0x1]
        %v839 = vld [vmem:[#allocation10] sm:$0x1]
        %vm840 = vcmask 261120
        %v841 = vsel %vm840, %v834, 0.0
        %842 = vadd.xlane.f32.xlu0 %v841
        %v843 = vpop.xlane.xlu0 %842
        %v844 = vsel %vm840, %v835, 0.0
        %845 = vadd.xlane.f32.xlu0 %v844
        %v846 = vpop.xlane.xlu0 %845
        %v847 = vrcp.pop 32.0
        %v848 = vmul.f32 %v843, %v847
        %v849 = vmul.f32 %v846, %v847
        %v850 = vsub.f32 %v834, %v848
        %v851 = vsub.f32 %v835, %v849
        %v852 = vmul.f32 %v850, %v850
        %v853 = vmul.f32 %v851, %v851
        %v854 = vsel %vm840, %v852, 0.0
        %855 = vadd.xlane.f32.xlu0 %v854
        %v856 = vpop.xlane.xlu0 %855
        %v857 = vsel %vm840, %v853, 0.0
        %858 = vadd.xlane.f32.xlu0 %v857
        %v859 = vpop.xlane.xlu0 %858
        %v860 = vmul.f32 %v856, %v847
        %v861 = vmul.f32 %v859, %v847
        %v862 = vadd.f32 %v860, 1e-06
        %v863 = vadd.f32 %v861, 1e-06
        %v864 = vrsqrt.pop %v862
        %v865 = vrsqrt.pop %v863
        %v866 = vmul.f32 %v850, %v864
        %v867 = vmul.f32 %v851, %v865
        %v869 = vlaneseq
        %v870 = vshrl.u32 %v869, 7
        %v871 = vsub.s32 0, %v870
        %v872 = vrot.slane %v838, %v871
        %v874 = vmul.f32 %v866, %v872
        %v875 = vmul.f32 %v867, %v872
        %v877 = vlaneseq
        %v878 = vshrl.u32 %v877, 7
        %v879 = vsub.s32 0, %v878
        %v880 = vrot.slane %v839, %v879
        %v882 = vadd.f32 %v874, %v880
        %v883 = vadd.f32 %v875, %v880
        %v884 = vld [vmem:[#allocation5] sm:$0xff]
        %v885 = vld [vmem:[#allocation5 + $0x8] sm:$0xff]
        %v886 = vadd.f32 %v882, %v884
        %v887 = vadd.f32 %v883, %v885
        %v888 = vpack.c.bf16 %v887, %v886
        %v889 = vld [vmem:[#allocation11] sm:$0xf]
        %v890 = vld [vmem:[#allocation11 + $0x4] sm:$0xf]
        %v891 = vld [vmem:[#allocation11 + $0x8] sm:$0xf]
        %v892 = vld [vmem:[#allocation11 + $0xc] sm:$0xf]
        %v897 = vunpack.c.l.b16 %v889
        %v898 = vunpack.c.l.b16 %v890
        %v899 = vunpack.c.l.b16 %v891
        %v900 = vunpack.c.l.b16 %v892
        %v901 = vpack.c.b16 %v898, %v897
        %v902 = vpack.c.b16 %v900, %v899
        %v906 = vsel %vm840, %v888, 0
        %908 = vmatprep.subr.bf16.mxu0 0
        %909 = vmatpush1.bf16.msra.mxu0 0
        %910 = vmatprep.subr.bf16.mxu0 0
        %911 = vmatpush1.bf16.msra.mxu0 0
        %912 = vmatprep.subr.bf16.mxu0 0
        %913 = vmatpush1.bf16.msra.mxu0 0
        %914 = vmatprep.subr.bf16.mxu0 0
        %915 = vmatpush1.bf16.msra.mxu0 0
        %916 = vmatprep.subr.bf16.mxu0 0
        %917 = vmatpush1.bf16.msra.mxu0 0
        %918 = vmatprep.subr.bf16.mxu0 0
        %919 = vmatpush1.bf16.msra.mxu0 0
        %920 = vmatprep.subr.bf16.mxu0 0
        %921 = vmatpush1.bf16.msra.mxu0 %v902
        %922 = vmatprep.subr.bf16.mxu0 0
        %923 = vmatpush1.bf16.msra.mxu0 %v901
        %924 = vmatprep.subr.bf16.mxu0 0
        %925 = vmatpush2.bf16.msra.mxu0 0
        %926 = vmatprep.subr.bf16.mxu0 0
        %927 = vmatpush2.bf16.msra.mxu0 0
        %928 = vmatprep.subr.bf16.mxu0 0
        %929 = vmatpush2.bf16.msra.mxu0 0
        %930 = vmatprep.subr.bf16.mxu0 0
        %931 = vmatpush2.bf16.msra.mxu0 0
        %932 = vmatprep.subr.bf16.mxu0 0
        %933 = vmatpush2.bf16.msra.mxu0 0
        %934 = vmatprep.subr.bf16.mxu0 0
        %935 = vmatpush2.bf16.msra.mxu0 0
        %936 = vmatprep.subr.bf16.mxu0 0
        %937 = vmatpush2.bf16.msra.mxu0 0
        %938 = vmatprep.subr.bf16.mxu0 0
        %939 = vmatpush2.bf16.msra.mxu0 0
        %940 = vmatprep.mubr.bf16.mxu0 0
        %941 = vmatmul.mubr.bf16.gmra.mxu0 %v906
        %v942 = vpop.f32.mrf.mxu0
        %v943 = vadd.f32 0.0, %v942
        %v944 = vpop.f32.mrf.mxu0
        %v945 = vpop.f32.mrf.mxu0
        %v946 = vadd.f32 0.0, %v945
        %v947 = vpop.f32.mrf.mxu0
        %948 = vdwg.mxu0
        %v949 = vmul.f32 %v943, 0.59460354
        %v950 = vmul.f32 %v946, 0.59460354
        %v951 = vld [vmem:[#allocation13] sm:$0xf]
        %v952 = vld [vmem:[#allocation13 + $0x4] sm:$0xf]
        %v953 = vld [vmem:[#allocation13 + $0x8] sm:$0xf]
        %v954 = vld [vmem:[#allocation13 + $0xc] sm:$0xf]
        %v959 = vunpack.c.l.b16 %v951
        %v960 = vunpack.c.l.b16 %v952
        %v961 = vunpack.c.l.b16 %v953
        %v962 = vunpack.c.l.b16 %v954
        %v963 = vpack.c.b16 %v960, %v959
        %v964 = vpack.c.b16 %v962, %v961
        %967 = vmatprep.subr.bf16.mxu0 0
        %968 = vmatpush1.bf16.msra.mxu0 0
        %969 = vmatprep.subr.bf16.mxu0 0
        %970 = vmatpush1.bf16.msra.mxu0 0
        %971 = vmatprep.subr.bf16.mxu0 0
        %972 = vmatpush1.bf16.msra.mxu0 0
        %973 = vmatprep.subr.bf16.mxu0 0
        %974 = vmatpush1.bf16.msra.mxu0 0
        %975 = vmatprep.subr.bf16.mxu0 0
        %976 = vmatpush1.bf16.msra.mxu0 0
        %977 = vmatprep.subr.bf16.mxu0 0
        %978 = vmatpush1.bf16.msra.mxu0 0
        %979 = vmatprep.subr.bf16.mxu0 0
        %980 = vmatpush1.bf16.msra.mxu0 %v964
        %981 = vmatprep.subr.bf16.mxu0 0
        %982 = vmatpush1.bf16.msra.mxu0 %v963
        %983 = vmatprep.subr.bf16.mxu0 0
        %984 = vmatpush2.bf16.msra.mxu0 0
        %985 = vmatprep.subr.bf16.mxu0 0
        %986 = vmatpush2.bf16.msra.mxu0 0
        %987 = vmatprep.subr.bf16.mxu0 0
        %988 = vmatpush2.bf16.msra.mxu0 0
        %989 = vmatprep.subr.bf16.mxu0 0
        %990 = vmatpush2.bf16.msra.mxu0 0
        %991 = vmatprep.subr.bf16.mxu0 0
        %992 = vmatpush2.bf16.msra.mxu0 0
        %993 = vmatprep.subr.bf16.mxu0 0
        %994 = vmatpush2.bf16.msra.mxu0 0
        %995 = vmatprep.subr.bf16.mxu0 0
        %996 = vmatpush2.bf16.msra.mxu0 0
        %997 = vmatprep.subr.bf16.mxu0 0
        %998 = vmatpush2.bf16.msra.mxu0 0
        %999 = vmatprep.mubr.bf16.mxu0 0
        %1000 = vmatmul.mubr.bf16.gmra.mxu0 %v906
        %v1001 = vpop.f32.mrf.mxu0
        %v1002 = vadd.f32 0.0, %v1001
        %v1003 = vpop.f32.mrf.mxu0
        %v1004 = vpop.f32.mrf.mxu0
        %v1005 = vadd.f32 0.0, %v1004
        %v1006 = vpop.f32.mrf.mxu0
        %1007 = vdwg.mxu0
        %v1008 = vmul.f32 %v1002, 0.59460354
        %v1009 = vmul.f32 %v1005, 0.59460354
        %v1010 = vld [vmem:[#allocation14] sm:$0xf]
        %v1011 = vld [vmem:[#allocation14 + $0x4] sm:$0xf]
        %v1012 = vld [vmem:[#allocation14 + $0x8] sm:$0xf]
        %v1013 = vld [vmem:[#allocation14 + $0xc] sm:$0xf]
        %v1018 = vunpack.c.l.b16 %v1010
        %v1019 = vunpack.c.l.b16 %v1011
        %v1020 = vunpack.c.l.b16 %v1012
        %v1021 = vunpack.c.l.b16 %v1013
        %v1022 = vpack.c.b16 %v1019, %v1018
        %v1023 = vpack.c.b16 %v1021, %v1020
        %1026 = vmatprep.subr.bf16.mxu0 0
        %1027 = vmatpush1.bf16.msra.mxu0 0
        %1028 = vmatprep.subr.bf16.mxu0 0
        %1029 = vmatpush1.bf16.msra.mxu0 0
        %1030 = vmatprep.subr.bf16.mxu0 0
        %1031 = vmatpush1.bf16.msra.mxu0 0
        %1032 = vmatprep.subr.bf16.mxu0 0
        %1033 = vmatpush1.bf16.msra.mxu0 0
        %1034 = vmatprep.subr.bf16.mxu0 0
        %1035 = vmatpush1.bf16.msra.mxu0 0
        %1036 = vmatprep.subr.bf16.mxu0 0
        %1037 = vmatpush1.bf16.msra.mxu0 0
        %1038 = vmatprep.subr.bf16.mxu0 0
        %1039 = vmatpush1.bf16.msra.mxu0 %v1023
        %1040 = vmatprep.subr.bf16.mxu0 0
        %1041 = vmatpush1.bf16.msra.mxu0 %v1022
        %1042 = vmatprep.subr.bf16.mxu0 0
        %1043 = vmatpush2.bf16.msra.mxu0 0
        %1044 = vmatprep.subr.bf16.mxu0 0
        %1045 = vmatpush2.bf16.msra.mxu0 0
        %1046 = vmatprep.subr.bf16.mxu0 0
        %1047 = vmatpush2.bf16.msra.mxu0 0
        %1048 = vmatprep.subr.bf16.mxu0 0
        %1049 = vmatpush2.bf16.msra.mxu0 0
        %1050 = vmatprep.subr.bf16.mxu0 0
        %1051 = vmatpush2.bf16.msra.mxu0 0
        %1052 = vmatprep.subr.bf16.mxu0 0
        %1053 = vmatpush2.bf16.msra.mxu0 0
        %1054 = vmatprep.subr.bf16.mxu0 0
        %1055 = vmatpush2.bf16.msra.mxu0 0
        %1056 = vmatprep.subr.bf16.mxu0 0
        %1057 = vmatpush2.bf16.msra.mxu0 0
        %1058 = vmatprep.mubr.bf16.mxu0 0
        %1059 = vmatmul.mubr.bf16.gmra.mxu0 %v906
        %v1060 = vpop.f32.mrf.mxu0
        %v1061 = vadd.f32 0.0, %v1060
        %v1062 = vpop.f32.mrf.mxu0
        %v1063 = vpop.f32.mrf.mxu0
        %v1064 = vadd.f32 0.0, %v1063
        %v1065 = vpop.f32.mrf.mxu0
        %1066 = vdwg.mxu0
        %v1067 = vld [vmem:[#allocation7] sm:$0xff]
        %v1068 = vld [vmem:[#allocation7 + $0x8] sm:$0xff]
        %v1069 = vld [vmem:[#allocation7 + $0x10] sm:$0xff]
        %v1070 = vld [vmem:[#allocation7 + $0x18] sm:$0xff]
        %v1071 = vsel %vm840, %v949, -inf
        %1072 = vmax.xlane.f32.xlu0 %v1071
        %v1073 = vpop.xlane.xlu0 %1072
        %v1074 = vsel %vm840, %v950, -inf
        %1075 = vmax.xlane.f32.xlu0 %v1074
        %v1076 = vpop.xlane.xlu0 %1075
        %v1077 = vsub.f32 %v949, %v1073
        %v1078 = vsub.f32 %v950, %v1076
        %v1079 = vmul.f32 %v1077, 1.442695
        %v1080 = vpow.pop %v1079
        %v1081 = vmul.f32 %v1078, 1.442695
        %v1082 = vpow.pop %v1081
        %v1084 = vsel %vm840, %v1080, 0
        %v1087 = vsel %vm840, %v1082, 0
        %1089 = vmatprep.subr.mxu0 0.0
        %1090 = vmatpush1.msra.mxu0 0.0
        %1091 = vmatprep.subr.mxu0 0.0
        %1092 = vmatpush1.msra.mxu0 0.0
        %1093 = vmatprep.subr.mxu0 0.0
        %1094 = vmatpush1.msra.mxu0 0.0
        %1095 = vmatprep.subr.mxu0 0.0
        %1096 = vmatpush1.msra.mxu0 0.0
        %1097 = vmatprep.subr.mxu0 0.0
        %1098 = vmatpush1.msra.mxu0 0.0
        %1099 = vmatprep.subr.mxu0 0.0
        %1100 = vmatpush1.msra.mxu0 0.0
        %1101 = vmatprep.subr.mxu0 0.0
        %1102 = vmatpush1.msra.mxu0 0.0
        %1103 = vmatprep.subr.mxu0 0.0
        %1104 = vmatpush1.msra.mxu0 0.0
        %1105 = vmatprep.subr.mxu0 0.0
        %1106 = vmatpush1.msra.mxu0 0.0
        %1107 = vmatprep.subr.mxu0 0.0
        %1108 = vmatpush1.msra.mxu0 0.0
        %1109 = vmatprep.subr.mxu0 0.0
        %1110 = vmatpush1.msra.mxu0 0.0
        %1111 = vmatprep.subr.mxu0 0.0
        %1112 = vmatpush1.msra.mxu0 0.0
        %1113 = vmatprep.subr.mxu0 0.0
        %1114 = vmatpush1.msra.mxu0 %v1070
        %1115 = vmatprep.subr.mxu0 0.0
        %1116 = vmatpush1.msra.mxu0 %v1069
        %1117 = vmatprep.subr.mxu0 0.0
        %1118 = vmatpush1.msra.mxu0 %v1068
        %1119 = vmatprep.subr.mxu0 0.0
        %1120 = vmatpush1.msra.mxu0 %v1067
        %1121 = vmatprep.subr.mxu0 0.0
        %1122 = vmatpush2.msra.mxu0 0.0
        %1123 = vmatprep.subr.mxu0 0.0
        %1124 = vmatpush2.msra.mxu0 0.0
        %1125 = vmatprep.subr.mxu0 0.0
        %1126 = vmatpush2.msra.mxu0 0.0
        %1127 = vmatprep.subr.mxu0 0.0
        %1128 = vmatpush2.msra.mxu0 0.0
        %1129 = vmatprep.subr.mxu0 0.0
        %1130 = vmatpush2.msra.mxu0 0.0
        %1131 = vmatprep.subr.mxu0 0.0
        %1132 = vmatpush2.msra.mxu0 0.0
        %1133 = vmatprep.subr.mxu0 0.0
        %1134 = vmatpush2.msra.mxu0 0.0
        %1135 = vmatprep.subr.mxu0 0.0
        %1136 = vmatpush2.msra.mxu0 0.0
        %1137 = vmatprep.subr.mxu0 0.0
        %1138 = vmatpush2.msra.mxu0 0.0
        %1139 = vmatprep.subr.mxu0 0.0
        %1140 = vmatpush2.msra.mxu0 0.0
        %1141 = vmatprep.subr.mxu0 0.0
        %1142 = vmatpush2.msra.mxu0 0.0
        %1143 = vmatprep.subr.mxu0 0.0
        %1144 = vmatpush2.msra.mxu0 0.0
        %1145 = vmatprep.subr.mxu0 0.0
        %1146 = vmatpush2.msra.mxu0 0.0
        %1147 = vmatprep.subr.mxu0 0.0
        %1148 = vmatpush2.msra.mxu0 0.0
        %1149 = vmatprep.subr.mxu0 0.0
        %1150 = vmatpush2.msra.mxu0 0.0
        %1151 = vmatprep.subr.mxu0 0.0
        %1152 = vmatpush2.msra.mxu0 0.0
        %1153 = vmatprep.mubr.f32.mxu0 0.0
        %1154 = vmatmul.mubr.f32.gmra.mxu0 %v1084
        %v1155 = vpop.f32.mrf.mxu0
        %v1156 = vadd.f32 0.0, %v1155
        %v1157 = vpop.f32.mrf.mxu0
        %1158 = vmatprep.mubr.f32.mxu0 0.0
        %1159 = vmatmul.mubr.f32.gmra.mxu0 %v1087
        %v1160 = vpop.f32.mrf.mxu0
        %v1161 = vadd.f32 0.0, %v1160
        %v1162 = vpop.f32.mrf.mxu0
        %1163 = vdwg.mxu0
        %v1164 = vrcp.pop %v1156
        %v1165 = vrcp.pop %v1161
        %v1166 = vmul.f32 %v1080, %v1164
        %v1167 = vmul.f32 %v1082, %v1165
        %v1168 = vsel %vm840, %v1008, -inf
        %v1169 = vsel %vm840, %v1009, -inf
        %v1170 = vmax.f32 %v1168, %v1169
        %v1171 = vrot.slane %v1170, 4
        %v1172 = vmax.f32 %v1170, %v1171
        %v1173 = vrot.slane %v1172, 2
        %v1174 = vmax.f32 %v1172, %v1173
        %v1175 = vrot.slane %v1174, 1
        %v1176 = vmax.f32 %v1174, %v1175
        %v1177 = vsub.f32 %v1008, %v1176
        %v1178 = vsub.f32 %v1009, %v1176
        %v1179 = vmul.f32 %v1177, 1.442695
        %v1180 = vpow.pop %v1179
        %v1181 = vmul.f32 %v1178, 1.442695
        %v1182 = vpow.pop %v1181
        %v1183 = vsel %vm840, %v1180, 0.0
        %v1184 = vsel %vm840, %v1182, 0.0
        %v1185 = vadd.f32 %v1183, %v1184
        %v1186 = vrot.slane %v1185, 4
        %v1187 = vadd.f32 %v1185, %v1186
        %v1188 = vrot.slane %v1187, 2
        %v1189 = vadd.f32 %v1187, %v1188
        %v1190 = vrot.slane %v1189, 1
        %v1191 = vadd.f32 %v1189, %v1190
        %v1192 = vrcp.pop %v1191
        %v1193 = vmul.f32 %v1180, %v1192
        %v1194 = vmul.f32 %v1182, %v1192
        %1195 = vxpose.xlu0.b32.start [1/16] %v1193, 128
        %1196 = vxpose.xlu0.b32.cont [2/16] %v1194, 128
        %1197 = vxpose.xlu0.b32.cont [3/16] 0.0, 128
        %1198 = vxpose.xlu0.b32.cont [4/16] 0.0, 128
        %1199 = vxpose.xlu0.b32.cont [5/16] 0.0, 128
        %1200 = vxpose.xlu0.b32.cont [6/16] 0.0, 128
        %1201 = vxpose.xlu0.b32.cont [7/16] 0.0, 128
        %1202 = vxpose.xlu0.b32.cont [8/16] 0.0, 128
        %1203 = vxpose.xlu0.b32.cont [9/16] 0.0, 128
        %1204 = vxpose.xlu0.b32.cont [10/16] 0.0, 128
        %1205 = vxpose.xlu0.b32.cont [11/16] 0.0, 128
        %1206 = vxpose.xlu0.b32.cont [12/16] 0.0, 128
        %1207 = vxpose.xlu0.b32.cont [13/16] 0.0, 128
        %1208 = vxpose.xlu0.b32.cont [14/16] 0.0, 128
        %1209 = vxpose.xlu0.b32.cont [15/16] 0.0, 128
        %1210 = vxpose.xlu0.b32.end [16/16] 0.0, 128
        %v1211 = vpop.trf.xlu0
        %v1212 = vpop.trf.xlu0
        %v1213 = vpop.trf.xlu0
        %v1214 = vpop.trf.xlu0
        %v1215 = vpop.trf.xlu0
        %v1216 = vpop.trf.xlu0
        %v1217 = vpop.trf.xlu0
        %v1218 = vpop.trf.xlu0
        %v1219 = vpop.trf.xlu0
        %v1220 = vpop.trf.xlu0
        %v1221 = vpop.trf.xlu0
        %v1222 = vpop.trf.xlu0
        %v1223 = vpop.trf.xlu0
        %v1224 = vpop.trf.xlu0
        %v1225 = vpop.trf.xlu0
        %v1226 = vpop.trf.xlu0
        %vm1227 = vcmask 130048
        %v1229 = vsel %vm1227, %v1211, 0
        %v1232 = vsel %vm1227, %v1212, 0
        %v1235 = vsel %vm1227, %v1213, 0
        %v1238 = vsel %vm1227, %v1214, 0
        %1240 = vmatprep.subr.mxu0 0.0
        %1241 = vmatpush1.msra.mxu0 0.0
        %1242 = vmatprep.subr.mxu0 0.0
        %1243 = vmatpush1.msra.mxu0 0.0
        %1244 = vmatprep.subr.mxu0 0.0
        %1245 = vmatpush1.msra.mxu0 0.0
        %1246 = vmatprep.subr.mxu0 0.0
        %1247 = vmatpush1.msra.mxu0 0.0
        %1248 = vmatprep.subr.mxu0 0.0
        %1249 = vmatpush1.msra.mxu0 0.0
        %1250 = vmatprep.subr.mxu0 0.0
        %1251 = vmatpush1.msra.mxu0 0.0
        %1252 = vmatprep.subr.mxu0 0.0
        %1253 = vmatpush1.msra.mxu0 0.0
        %1254 = vmatprep.subr.mxu0 0.0
        %1255 = vmatpush1.msra.mxu0 0.0
        %1256 = vmatprep.subr.mxu0 0.0
        %1257 = vmatpush1.msra.mxu0 0.0
        %1258 = vmatprep.subr.mxu0 0.0
        %1259 = vmatpush1.msra.mxu0 0.0
        %1260 = vmatprep.subr.mxu0 0.0
        %1261 = vmatpush1.msra.mxu0 0.0
        %1262 = vmatprep.subr.mxu0 0.0
        %1263 = vmatpush1.msra.mxu0 0.0
        %1264 = vmatprep.subr.mxu0 0.0
        %1265 = vmatpush1.msra.mxu0 0.0
        %1266 = vmatprep.subr.mxu0 0.0
        %1267 = vmatpush1.msra.mxu0 0.0
        %1268 = vmatprep.subr.mxu0 0.0
        %1269 = vmatpush1.msra.mxu0 %v1064
        %1270 = vmatprep.subr.mxu0 0.0
        %1271 = vmatpush1.msra.mxu0 %v1061
        %1272 = vmatprep.subr.mxu0 0.0
        %1273 = vmatpush2.msra.mxu0 0.0
        %1274 = vmatprep.subr.mxu0 0.0
        %1275 = vmatpush2.msra.mxu0 0.0
        %1276 = vmatprep.subr.mxu0 0.0
        %1277 = vmatpush2.msra.mxu0 0.0
        %1278 = vmatprep.subr.mxu0 0.0
        %1279 = vmatpush2.msra.mxu0 0.0
        %1280 = vmatprep.subr.mxu0 0.0
        %1281 = vmatpush2.msra.mxu0 0.0
        %1282 = vmatprep.subr.mxu0 0.0
        %1283 = vmatpush2.msra.mxu0 0.0
        %1284 = vmatprep.subr.mxu0 0.0
        %1285 = vmatpush2.msra.mxu0 0.0
        %1286 = vmatprep.subr.mxu0 0.0
        %1287 = vmatpush2.msra.mxu0 0.0
        %1288 = vmatprep.subr.mxu0 0.0
        %1289 = vmatpush2.msra.mxu0 0.0
        %1290 = vmatprep.subr.mxu0 0.0
        %1291 = vmatpush2.msra.mxu0 0.0
        %1292 = vmatprep.subr.mxu0 0.0
        %1293 = vmatpush2.msra.mxu0 0.0
        %1294 = vmatprep.subr.mxu0 0.0
        %1295 = vmatpush2.msra.mxu0 0.0
        %1296 = vmatprep.subr.mxu0 0.0
        %1297 = vmatpush2.msra.mxu0 0.0
        %1298 = vmatprep.subr.mxu0 0.0
        %1299 = vmatpush2.msra.mxu0 0.0
        %1300 = vmatprep.subr.mxu0 0.0
        %1301 = vmatpush2.msra.mxu0 0.0
        %1302 = vmatprep.subr.mxu0 0.0
        %1303 = vmatpush2.msra.mxu0 0.0
        %1304 = vmatprep.mubr.f32.mxu0 0.0
        %1305 = vmatmul.mubr.f32.gmra.mxu0 %v1229
        %v1306 = vpop.f32.mrf.mxu0
        %v1307 = vadd.f32 0.0, %v1306
        %v1308 = vpop.f32.mrf.mxu0
        %1309 = vmatprep.mubr.f32.mxu0 0.0
        %1310 = vmatmul.mubr.f32.gmra.mxu0 %v1232
        %v1311 = vpop.f32.mrf.mxu0
        %v1312 = vadd.f32 0.0, %v1311
        %v1313 = vpop.f32.mrf.mxu0
        %1314 = vmatprep.mubr.f32.mxu0 0.0
        %1315 = vmatmul.mubr.f32.gmra.mxu0 %v1235
        %v1316 = vpop.f32.mrf.mxu0
        %v1317 = vadd.f32 0.0, %v1316
        %v1318 = vpop.f32.mrf.mxu0
        %1319 = vmatprep.mubr.f32.mxu0 0.0
        %1320 = vmatmul.mubr.f32.gmra.mxu0 %v1238
        %v1321 = vpop.f32.mrf.mxu0
        %v1322 = vadd.f32 0.0, %v1321
        %v1323 = vpop.f32.mrf.mxu0
        %1324 = vdwg.mxu0
        %v1325 = vmul.f32 %v1307, %v1067
        %v1326 = vmul.f32 %v1312, %v1068
        %v1327 = vmul.f32 %v1317, %v1069
        %v1328 = vmul.f32 %v1322, %v1070
        %v1330 = vsel %vm840, %v1166, 0
        %v1333 = vsel %vm840, %v1167, 0
        %1335 = vmatprep.subr.mxu0 0.0
        %1336 = vmatpush1.msra.mxu0 0.0
        %1337 = vmatprep.subr.mxu0 0.0
        %1338 = vmatpush1.msra.mxu0 0.0
        %1339 = vmatprep.subr.mxu0 0.0
        %1340 = vmatpush1.msra.mxu0 0.0
        %1341 = vmatprep.subr.mxu0 0.0
        %1342 = vmatpush1.msra.mxu0 0.0
        %1343 = vmatprep.subr.mxu0 0.0
        %1344 = vmatpush1.msra.mxu0 0.0
        %1345 = vmatprep.subr.mxu0 0.0
        %1346 = vmatpush1.msra.mxu0 0.0
        %1347 = vmatprep.subr.mxu0 0.0
        %1348 = vmatpush1.msra.mxu0 0.0
        %1349 = vmatprep.subr.mxu0 0.0
        %1350 = vmatpush1.msra.mxu0 0.0
        %1351 = vmatprep.subr.mxu0 0.0
        %1352 = vmatpush1.msra.mxu0 0.0
        %1353 = vmatprep.subr.mxu0 0.0
        %1354 = vmatpush1.msra.mxu0 0.0
        %1355 = vmatprep.subr.mxu0 0.0
        %1356 = vmatpush1.msra.mxu0 0.0
        %1357 = vmatprep.subr.mxu0 0.0
        %1358 = vmatpush1.msra.mxu0 0.0
        %1359 = vmatprep.subr.mxu0 0.0
        %1360 = vmatpush1.msra.mxu0 %v1328
        %1361 = vmatprep.subr.mxu0 0.0
        %1362 = vmatpush1.msra.mxu0 %v1327
        %1363 = vmatprep.subr.mxu0 0.0
        %1364 = vmatpush1.msra.mxu0 %v1326
        %1365 = vmatprep.subr.mxu0 0.0
        %1366 = vmatpush1.msra.mxu0 %v1325
        %1367 = vmatprep.subr.mxu0 0.0
        %1368 = vmatpush2.msra.mxu0 0.0
        %1369 = vmatprep.subr.mxu0 0.0
        %1370 = vmatpush2.msra.mxu0 0.0
        %1371 = vmatprep.subr.mxu0 0.0
        %1372 = vmatpush2.msra.mxu0 0.0
        %1373 = vmatprep.subr.mxu0 0.0
        %1374 = vmatpush2.msra.mxu0 0.0
        %1375 = vmatprep.subr.mxu0 0.0
        %1376 = vmatpush2.msra.mxu0 0.0
        %1377 = vmatprep.subr.mxu0 0.0
        %1378 = vmatpush2.msra.mxu0 0.0
        %1379 = vmatprep.subr.mxu0 0.0
        %1380 = vmatpush2.msra.mxu0 0.0
        %1381 = vmatprep.subr.mxu0 0.0
        %1382 = vmatpush2.msra.mxu0 0.0
        %1383 = vmatprep.subr.mxu0 0.0
        %1384 = vmatpush2.msra.mxu0 0.0
        %1385 = vmatprep.subr.mxu0 0.0
        %1386 = vmatpush2.msra.mxu0 0.0
        %1387 = vmatprep.subr.mxu0 0.0
        %1388 = vmatpush2.msra.mxu0 0.0
        %1389 = vmatprep.subr.mxu0 0.0
        %1390 = vmatpush2.msra.mxu0 0.0
        %1391 = vmatprep.subr.mxu0 0.0
        %1392 = vmatpush2.msra.mxu0 0.0
        %1393 = vmatprep.subr.mxu0 0.0
        %1394 = vmatpush2.msra.mxu0 0.0
        %1395 = vmatprep.subr.mxu0 0.0
        %1396 = vmatpush2.msra.mxu0 0.0
        %1397 = vmatprep.subr.mxu0 0.0
        %1398 = vmatpush2.msra.mxu0 0.0
        %1399 = vmatprep.mubr.f32.mxu0 0.0
        %1400 = vmatmul.mubr.f32.gmra.mxu0 %v1330
        %v1401 = vpop.f32.mrf.mxu0
        %v1402 = vadd.f32 0.0, %v1401
        %v1403 = vpop.f32.mrf.mxu0
        %1404 = vmatprep.mubr.f32.mxu0 0.0
        %1405 = vmatmul.mubr.f32.gmra.mxu0 %v1333
        %v1406 = vpop.f32.mrf.mxu0
        %v1407 = vadd.f32 0.0, %v1406
        %v1408 = vpop.f32.mrf.mxu0
        %1409 = vdwg.mxu0
        %v1410 = vpack.c.bf16 %v1407, %v1402
        %v1411 = vld [vmem:[#allocation16] sm:$0xf]
        %v1412 = vld [vmem:[#allocation16 + $0x4] sm:$0xf]
        %v1413 = vld [vmem:[#allocation16 + $0x8] sm:$0xf]
        %v1414 = vld [vmem:[#allocation16 + $0xc] sm:$0xf]
        %v1415 = vld [vmem:[%s10] sm:$0x1]
        %v1417 = vlaneseq
        %v1418 = vshrl.u32 %v1417, 7
        %v1419 = vsub.s32 0, %v1418
        %v1420 = vrot.slane %v1415, %v1419
        %v1426 = vunpack.c.l.b16 %v1411
        %v1427 = vunpack.c.l.b16 %v1412
        %v1428 = vunpack.c.l.b16 %v1413
        %v1429 = vunpack.c.l.b16 %v1414
        %v1430 = vpack.c.b16 %v1427, %v1426
        %v1431 = vpack.c.b16 %v1429, %v1428
        %v1435 = vsel %vm840, %v1410, 0
        %1437 = vmatprep.subr.bf16.mxu0 0
        %1438 = vmatpush1.bf16.msra.mxu0 0
        %1439 = vmatprep.subr.bf16.mxu0 0
        %1440 = vmatpush1.bf16.msra.mxu0 0
        %1441 = vmatprep.subr.bf16.mxu0 0
        %1442 = vmatpush1.bf16.msra.mxu0 0
        %1443 = vmatprep.subr.bf16.mxu0 0
        %1444 = vmatpush1.bf16.msra.mxu0 0
        %1445 = vmatprep.subr.bf16.mxu0 0
        %1446 = vmatpush1.bf16.msra.mxu0 0
        %1447 = vmatprep.subr.bf16.mxu0 0
        %1448 = vmatpush1.bf16.msra.mxu0 0
        %1449 = vmatprep.subr.bf16.mxu0 0
        %1450 = vmatpush1.bf16.msra.mxu0 %v1431
        %1451 = vmatprep.subr.bf16.mxu0 0
        %1452 = vmatpush1.bf16.msra.mxu0 %v1430
        %1453 = vmatprep.subr.bf16.mxu0 0
        %1454 = vmatpush2.bf16.msra.mxu0 0
        %1455 = vmatprep.subr.bf16.mxu0 0
        %1456 = vmatpush2.bf16.msra.mxu0 0
        %1457 = vmatprep.subr.bf16.mxu0 0
        %1458 = vmatpush2.bf16.msra.mxu0 0
        %1459 = vmatprep.subr.bf16.mxu0 0
        %1460 = vmatpush2.bf16.msra.mxu0 0
        %1461 = vmatprep.subr.bf16.mxu0 0
        %1462 = vmatpush2.bf16.msra.mxu0 0
        %1463 = vmatprep.subr.bf16.mxu0 0
        %1464 = vmatpush2.bf16.msra.mxu0 0
        %1465 = vmatprep.subr.bf16.mxu0 0
        %1466 = vmatpush2.bf16.msra.mxu0 0
        %1467 = vmatprep.subr.bf16.mxu0 0
        %1468 = vmatpush2.bf16.msra.mxu0 0
        %1469 = vmatprep.mubr.bf16.mxu0 0
        %1470 = vmatmul.mubr.bf16.gmra.mxu0 %v1435
        %v1471 = vpop.f32.mrf.mxu0
        %v1472 = vadd.f32 %v1420, %v1471
        %v1473 = vpop.f32.mrf.mxu0
        %v1474 = vpop.f32.mrf.mxu0
        %v1475 = vadd.f32 %v1420, %v1474
        %v1476 = vpop.f32.mrf.mxu0
        %1477 = vdwg.mxu0
        %v1478 = vadd.f32 %v834, %v1472
        %v1479 = vadd.f32 %v835, %v1475
        %v1480 = vld [vmem:[%s11] sm:$0x1]
        %v1481 = vld [vmem:[%s12] sm:$0x1]
        %v1482 = vsel %vm840, %v1478, 0.0
        %1483 = vadd.xlane.f32.xlu0 %v1482
        %v1484 = vpop.xlane.xlu0 %1483
        %v1485 = vsel %vm840, %v1479, 0.0
        %1486 = vadd.xlane.f32.xlu0 %v1485
        %v1487 = vpop.xlane.xlu0 %1486
        %v1488 = vmul.f32 %v1484, %v847
        %v1489 = vmul.f32 %v1487, %v847
        %v1490 = vsub.f32 %v1478, %v1488
        %v1491 = vsub.f32 %v1479, %v1489
        %v1492 = vmul.f32 %v1490, %v1490
        %v1493 = vmul.f32 %v1491, %v1491
        %v1494 = vsel %vm840, %v1492, 0.0
        %1495 = vadd.xlane.f32.xlu0 %v1494
        %v1496 = vpop.xlane.xlu0 %1495
        %v1497 = vsel %vm840, %v1493, 0.0
        %1498 = vadd.xlane.f32.xlu0 %v1497
        %v1499 = vpop.xlane.xlu0 %1498
        %v1500 = vmul.f32 %v1496, %v847
        %v1501 = vmul.f32 %v1499, %v847
        %v1502 = vadd.f32 %v1500, 1e-06
        %v1503 = vadd.f32 %v1501, 1e-06
        %v1504 = vrsqrt.pop %v1502
        %v1505 = vrsqrt.pop %v1503
        %v1506 = vmul.f32 %v1490, %v1504
        %v1507 = vmul.f32 %v1491, %v1505
        %v1509 = vlaneseq
        %v1510 = vshrl.u32 %v1509, 7
        %v1511 = vsub.s32 0, %v1510
        %v1512 = vrot.slane %v1480, %v1511
        %v1514 = vmul.f32 %v1506, %v1512
        %v1515 = vmul.f32 %v1507, %v1512
        %v1517 = vlaneseq
        %v1518 = vshrl.u32 %v1517, 7
        %v1519 = vsub.s32 0, %v1518
        %v1520 = vrot.slane %v1481, %v1519
        %v1522 = vadd.f32 %v1514, %v1520
        %v1523 = vadd.f32 %v1515, %v1520
        %v1524 = vpack.c.bf16 %v1523, %v1522
        %v1525 = vld [vmem:[#allocation17] sm:$0xf]
        %v1526 = vld [vmem:[#allocation17 + $0x4] sm:$0xf]
        %v1527 = vld [vmem:[#allocation17 + $0x8] sm:$0xf]
        %v1528 = vld [vmem:[#allocation17 + $0xc] sm:$0xf]
        %v1529 = vld [vmem:[%s14] sm:$0x1]
        %v1531 = vlaneseq
        %v1532 = vshrl.u32 %v1531, 7
        %v1533 = vsub.s32 0, %v1532
        %v1534 = vrot.slane %v1529, %v1533
        %v1540 = vunpack.c.l.b16 %v1525
        %v1541 = vunpack.c.l.b16 %v1526
        %v1542 = vunpack.c.l.b16 %v1527
        %v1543 = vunpack.c.l.b16 %v1528
        %v1544 = vpack.c.b16 %v1541, %v1540
        %v1545 = vpack.c.b16 %v1543, %v1542
        %v1549 = vsel %vm840, %v1524, 0
        %1551 = vmatprep.subr.bf16.mxu0 0
        %1552 = vmatpush1.bf16.msra.mxu0 0
        %1553 = vmatprep.subr.bf16.mxu0 0
        %1554 = vmatpush1.bf16.msra.mxu0 0
        %1555 = vmatprep.subr.bf16.mxu0 0
        %1556 = vmatpush1.bf16.msra.mxu0 0
        %1557 = vmatprep.subr.bf16.mxu0 0
        %1558 = vmatpush1.bf16.msra.mxu0 0
        %1559 = vmatprep.subr.bf16.mxu0 0
        %1560 = vmatpush1.bf16.msra.mxu0 0
        %1561 = vmatprep.subr.bf16.mxu0 0
        %1562 = vmatpush1.bf16.msra.mxu0 0
        %1563 = vmatprep.subr.bf16.mxu0 0
        %1564 = vmatpush1.bf16.msra.mxu0 %v1545
        %1565 = vmatprep.subr.bf16.mxu0 0
        %1566 = vmatpush1.bf16.msra.mxu0 %v1544
        %1567 = vmatprep.subr.bf16.mxu0 0
        %1568 = vmatpush2.bf16.msra.mxu0 0
        %1569 = vmatprep.subr.bf16.mxu0 0
        %1570 = vmatpush2.bf16.msra.mxu0 0
        %1571 = vmatprep.subr.bf16.mxu0 0
        %1572 = vmatpush2.bf16.msra.mxu0 0
        %1573 = vmatprep.subr.bf16.mxu0 0
        %1574 = vmatpush2.bf16.msra.mxu0 0
        %1575 = vmatprep.subr.bf16.mxu0 0
        %1576 = vmatpush2.bf16.msra.mxu0 0
        %1577 = vmatprep.subr.bf16.mxu0 0
        %1578 = vmatpush2.bf16.msra.mxu0 0
        %1579 = vmatprep.subr.bf16.mxu0 0
        %1580 = vmatpush2.bf16.msra.mxu0 0
        %1581 = vmatprep.subr.bf16.mxu0 0
        %1582 = vmatpush2.bf16.msra.mxu0 0
        %1583 = vmatprep.mubr.bf16.mxu0 0
        %1584 = vmatmul.mubr.bf16.gmra.mxu0 %v1549
        %v1585 = vpop.f32.mrf.mxu0
        %v1586 = vadd.f32 %v1534, %v1585
        %v1587 = vpop.f32.mrf.mxu0
        %v1588 = vpop.f32.mrf.mxu0
        %v1589 = vadd.f32 %v1534, %v1588
        %v1590 = vpop.f32.mrf.mxu0
        %1591 = vdwg.mxu0
        %v1592 = vmul.f32 %v1586, %v1586
        %v1593 = vmul.f32 %v1589, %v1589
        %v1594 = vmul.f32 %v1586, %v1592
        %v1595 = vmul.f32 %v1589, %v1593
        %v1596 = vmul.f32 %v1594, 0.044715
        %v1597 = vmul.f32 %v1595, 0.044715
        %v1598 = vadd.f32 %v1586, %v1596
        %v1599 = vadd.f32 %v1589, %v1597
        %v1600 = vmul.f32 %v1598, 0.7978846
        %v1601 = vmul.f32 %v1599, 0.7978846
        %v1602 = vtanh.pop %v1600
        %v1603 = vtanh.pop %v1601
        %v1604 = vadd.f32 %v1602, 1.0
        %v1605 = vadd.f32 %v1603, 1.0
        %v1606 = vmul.f32 %v1604, 0.5
        %v1607 = vmul.f32 %v1605, 0.5
        %v1608 = vmul.f32 %v1586, %v1606
        %v1609 = vmul.f32 %v1589, %v1607
        %v1610 = vpack.c.bf16 %v1609, %v1608
        %v1611 = vld [vmem:[%s15] sm:$0xf]
        %v1612 = vld [vmem:[%s15 + $0x4] sm:$0xf]
        %v1613 = vld [vmem:[%s15 + $0x8] sm:$0xf]
        %v1614 = vld [vmem:[%s15 + $0xc] sm:$0xf]
        %v1615 = vld [vmem:[%s15 + $0x10] sm:$0xf]
        %v1616 = vld [vmem:[%s15 + $0x14] sm:$0xf]
        %v1617 = vld [vmem:[%s15 + $0x18] sm:$0xf]
        %v1618 = vld [vmem:[%s15 + $0x1c] sm:$0xf]
        %v1619 = vld [vmem:[%s16] sm:$0x1]
        %v1621 = vlaneseq
        %v1622 = vshrl.u32 %v1621, 7
        %v1623 = vsub.s32 0, %v1622
        %v1624 = vrot.slane %v1619, %v1623
        %v1634 = vunpack.c.l.b16 %v1611
        %v1635 = vunpack.c.l.b16 %v1612
        %v1636 = vunpack.c.l.b16 %v1613
        %v1637 = vunpack.c.l.b16 %v1614
        %v1638 = vunpack.c.l.b16 %v1615
        %v1639 = vunpack.c.l.b16 %v1616
        %v1640 = vunpack.c.l.b16 %v1617
        %v1641 = vunpack.c.l.b16 %v1618
        %v1642 = vpack.c.b16 %v1635, %v1634
        %v1643 = vpack.c.b16 %v1637, %v1636
        %v1644 = vpack.c.b16 %v1639, %v1638
        %v1645 = vpack.c.b16 %v1641, %v1640
        %vm1650 = vcmask 523264
        %v1652 = vsel %vm1650, %v1610, 0
        %1654 = vmatprep.subr.bf16.mxu0 0
        %1655 = vmatpush1.bf16.msra.mxu0 0
        %1656 = vmatprep.subr.bf16.mxu0 0
        %1657 = vmatpush1.bf16.msra.mxu0 0
        %1658 = vmatprep.subr.bf16.mxu0 0
        %1659 = vmatpush1.bf16.msra.mxu0 0
        %1660 = vmatprep.subr.bf16.mxu0 0
        %1661 = vmatpush1.bf16.msra.mxu0 0
        %1662 = vmatprep.subr.bf16.mxu0 0
        %1663 = vmatpush1.bf16.msra.mxu0 %v1645
        %1664 = vmatprep.subr.bf16.mxu0 0
        %1665 = vmatpush1.bf16.msra.mxu0 %v1644
        %1666 = vmatprep.subr.bf16.mxu0 0
        %1667 = vmatpush1.bf16.msra.mxu0 %v1643
        %1668 = vmatprep.subr.bf16.mxu0 0
        %1669 = vmatpush1.bf16.msra.mxu0 %v1642
        %1670 = vmatprep.subr.bf16.mxu0 0
        %1671 = vmatpush2.bf16.msra.mxu0 0
        %1672 = vmatprep.subr.bf16.mxu0 0
        %1673 = vmatpush2.bf16.msra.mxu0 0
        %1674 = vmatprep.subr.bf16.mxu0 0
        %1675 = vmatpush2.bf16.msra.mxu0 0
        %1676 = vmatprep.subr.bf16.mxu0 0
        %1677 = vmatpush2.bf16.msra.mxu0 0
        %1678 = vmatprep.subr.bf16.mxu0 0
        %1679 = vmatpush2.bf16.msra.mxu0 0
        %1680 = vmatprep.subr.bf16.mxu0 0
        %1681 = vmatpush2.bf16.msra.mxu0 0
        %1682 = vmatprep.subr.bf16.mxu0 0
        %1683 = vmatpush2.bf16.msra.mxu0 0
        %1684 = vmatprep.subr.bf16.mxu0 0
        %1685 = vmatpush2.bf16.msra.mxu0 0
        %1686 = vmatprep.mubr.bf16.mxu0 0
        %1687 = vmatmul.mubr.bf16.gmra.mxu0 %v1652
        %v1688 = vpop.f32.mrf.mxu0
        %v1689 = vadd.f32 %v1624, %v1688
        %v1690 = vpop.f32.mrf.mxu0
        %v1691 = vpop.f32.mrf.mxu0
        %v1692 = vadd.f32 %v1624, %v1691
        %v1693 = vpop.f32.mrf.mxu0
        %1694 = vdwg.mxu0
        %v1695 = vmul.f32 %v1689, %v1689
        %v1696 = vmul.f32 %v1692, %v1692
        %v1697 = vmul.f32 %v1689, %v1695
        %v1698 = vmul.f32 %v1692, %v1696
        %v1699 = vmul.f32 %v1697, 0.044715
        %v1700 = vmul.f32 %v1698, 0.044715
        %v1701 = vadd.f32 %v1689, %v1699
        %v1702 = vadd.f32 %v1692, %v1700
        %v1703 = vmul.f32 %v1701, 0.7978846
        %v1704 = vmul.f32 %v1702, 0.7978846
        %v1705 = vtanh.pop %v1703
        %v1706 = vtanh.pop %v1704
        %v1707 = vadd.f32 %v1705, 1.0
        %v1708 = vadd.f32 %v1706, 1.0
        %v1709 = vmul.f32 %v1707, 0.5
        %v1710 = vmul.f32 %v1708, 0.5
        %v1711 = vmul.f32 %v1689, %v1709
        %v1712 = vmul.f32 %v1692, %v1710
        %v1713 = vpack.c.bf16 %v1712, %v1711
        %v1714 = vld [vmem:[%s17] sm:$0xf]
        %v1715 = vld [vmem:[%s17 + $0x4] sm:$0xf]
        %v1716 = vld [vmem:[%s17 + $0x8] sm:$0xf]
        %v1717 = vld [vmem:[%s17 + $0xc] sm:$0xf]
        %v1718 = vld [vmem:[%s17 + $0x10] sm:$0xf]
        %v1719 = vld [vmem:[%s17 + $0x14] sm:$0xf]
        %v1720 = vld [vmem:[%s17 + $0x18] sm:$0xf]
        %v1721 = vld [vmem:[%s17 + $0x1c] sm:$0xf]
        %v1722 = vld [vmem:[%s18] sm:$0x1]
        %v1724 = vlaneseq
        %v1725 = vshrl.u32 %v1724, 7
        %v1726 = vsub.s32 0, %v1725
        %v1727 = vrot.slane %v1722, %v1726
        %v1737 = vunpack.c.l.b16 %v1714
        %v1738 = vunpack.c.l.b16 %v1715
        %v1739 = vunpack.c.l.b16 %v1716
        %v1740 = vunpack.c.l.b16 %v1717
        %v1741 = vunpack.c.l.b16 %v1718
        %v1742 = vunpack.c.l.b16 %v1719
        %v1743 = vunpack.c.l.b16 %v1720
        %v1744 = vunpack.c.l.b16 %v1721
        %v1745 = vpack.c.b16 %v1738, %v1737
        %v1746 = vpack.c.b16 %v1740, %v1739
        %v1747 = vpack.c.b16 %v1742, %v1741
        %v1748 = vpack.c.b16 %v1744, %v1743
        %v1754 = vsel %vm1650, %v1713, 0
        %1756 = vmatprep.subr.bf16.mxu0 0
        %1757 = vmatpush1.bf16.msra.mxu0 0
        %1758 = vmatprep.subr.bf16.mxu0 0
        %1759 = vmatpush1.bf16.msra.mxu0 0
        %1760 = vmatprep.subr.bf16.mxu0 0
        %1761 = vmatpush1.bf16.msra.mxu0 0
        %1762 = vmatprep.subr.bf16.mxu0 0
        %1763 = vmatpush1.bf16.msra.mxu0 0
        %1764 = vmatprep.subr.bf16.mxu0 0
        %1765 = vmatpush1.bf16.msra.mxu0 %v1748
        %1766 = vmatprep.subr.bf16.mxu0 0
        %1767 = vmatpush1.bf16.msra.mxu0 %v1747
        %1768 = vmatprep.subr.bf16.mxu0 0
        %1769 = vmatpush1.bf16.msra.mxu0 %v1746
        %1770 = vmatprep.subr.bf16.mxu0 0
        %1771 = vmatpush1.bf16.msra.mxu0 %v1745
        %1772 = vmatprep.subr.bf16.mxu0 0
        %1773 = vmatpush2.bf16.msra.mxu0 0
        %1774 = vmatprep.subr.bf16.mxu0 0
        %1775 = vmatpush2.bf16.msra.mxu0 0
        %1776 = vmatprep.subr.bf16.mxu0 0
        %1777 = vmatpush2.bf16.msra.mxu0 0
        %1778 = vmatprep.subr.bf16.mxu0 0
        %1779 = vmatpush2.bf16.msra.mxu0 0
        %1780 = vmatprep.subr.bf16.mxu0 0
        %1781 = vmatpush2.bf16.msra.mxu0 0
        %1782 = vmatprep.subr.bf16.mxu0 0
        %1783 = vmatpush2.bf16.msra.mxu0 0
        %1784 = vmatprep.subr.bf16.mxu0 0
        %1785 = vmatpush2.bf16.msra.mxu0 0
        %1786 = vmatprep.subr.bf16.mxu0 0
        %1787 = vmatpush2.bf16.msra.mxu0 0
        %1788 = vmatprep.mubr.bf16.mxu0 0
        %1789 = vmatmul.mubr.bf16.gmra.mxu0 %v1754
        %v1790 = vpop.f32.mrf.mxu0
        %v1791 = vadd.f32 %v1727, %v1790
        %v1792 = vpop.f32.mrf.mxu0
        %v1793 = vpop.f32.mrf.mxu0
        %v1794 = vadd.f32 %v1727, %v1793
        %v1795 = vpop.f32.mrf.mxu0
        %1796 = vdwg.mxu0
        %v1797 = vadd.f32 %v1478, %v1791
        %v1798 = vadd.f32 %v1479, %v1794
        %v1799 = vld [vmem:[%s19] sm:$0x1]
        %v1800 = vmax.f32 %v1799, 0.0
        %vm1801 = vcmp.ne.f32.partialorder %v1799, %v1799
        %v1802 = vadd.f32 %v1799, 0.0
        %v1803 = vand.u32 2147483647, %v1799
        %v1804 = vsub.f32 0.0, %v1803
        %v1805 = vmul.f32 %v1804, 1.442695
        %v1806 = vpow.pop %v1805
        %v1807 = vadd.f32 %v1806, 1.0
        %v1808 = vlog2.pop %v1807
        %v1809 = vmul.f32 %v1808, 0.6931472
        %v1810 = vmul.f32 -0.5, %v1806
        %v1811 = vadd.f32 %v1810, 1.0
        %v1812 = vmul.f32 %v1811, %v1806
        %v1813 = vand.u32 2147483647, %v1806
        %vm1814 = vcmp.lt.f32.partialorder %v1813, 0.0004427343
        %v1815 = vsel %vm1814, %v1812, %v1809
        %v1816 = vadd.f32 %v1800, %v1815
        %v1817 = vsel %vm1801, %v1802, %v1816
        %1818 = vxpose.xlu0.b32.start [1/16] %v1797, 128
        %1819 = vxpose.xlu0.b32.cont [2/16] %v1798, 128
        %1820 = vxpose.xlu0.b32.cont [3/16] 0.0, 128
        %1821 = vxpose.xlu0.b32.cont [4/16] 0.0, 128
        %1822 = vxpose.xlu0.b32.cont [5/16] 0.0, 128
        %1823 = vxpose.xlu0.b32.cont [6/16] 0.0, 128
        %1824 = vxpose.xlu0.b32.cont [7/16] 0.0, 128
        %1825 = vxpose.xlu0.b32.cont [8/16] 0.0, 128
        %1826 = vxpose.xlu0.b32.cont [9/16] 0.0, 128
        %1827 = vxpose.xlu0.b32.cont [10/16] 0.0, 128
        %1828 = vxpose.xlu0.b32.cont [11/16] 0.0, 128
        %1829 = vxpose.xlu0.b32.cont [12/16] 0.0, 128
        %1830 = vxpose.xlu0.b32.cont [13/16] 0.0, 128
        %1831 = vxpose.xlu0.b32.cont [14/16] 0.0, 128
        %1832 = vxpose.xlu0.b32.cont [15/16] 0.0, 128
        %1833 = vxpose.xlu0.b32.end [16/16] 0.0, 128
        %v1834 = vpop.trf.xlu0
        %v1835 = vpop.trf.xlu0
        %v1836 = vpop.trf.xlu0
        %v1837 = vpop.trf.xlu0
        %v1838 = vpop.trf.xlu0
        %v1839 = vpop.trf.xlu0
        %v1840 = vpop.trf.xlu0
        %v1841 = vpop.trf.xlu0
        %v1842 = vpop.trf.xlu0
        %v1843 = vpop.trf.xlu0
        %v1844 = vpop.trf.xlu0
        %v1845 = vpop.trf.xlu0
        %v1846 = vpop.trf.xlu0
        %v1847 = vpop.trf.xlu0
        %v1848 = vpop.trf.xlu0
        %v1849 = vpop.trf.xlu0
        %v1851 = vsel %vm1227, %v1834, 0
        %v1854 = vsel %vm1227, %v1835, 0
        %v1857 = vsel %vm1227, %v1836, 0
        %v1860 = vsel %vm1227, %v1837, 0
        %1862 = vmatprep.subr.mxu0 0.0
        %1863 = vmatpush1.msra.mxu0 0.0
        %1864 = vmatprep.subr.mxu0 0.0
        %1865 = vmatpush1.msra.mxu0 0.0
        %1866 = vmatprep.subr.mxu0 0.0
        %1867 = vmatpush1.msra.mxu0 0.0
        %1868 = vmatprep.subr.mxu0 0.0
        %1869 = vmatpush1.msra.mxu0 0.0
        %1870 = vmatprep.subr.mxu0 0.0
        %1871 = vmatpush1.msra.mxu0 0.0
        %1872 = vmatprep.subr.mxu0 0.0
        %1873 = vmatpush1.msra.mxu0 0.0
        %1874 = vmatprep.subr.mxu0 0.0
        %1875 = vmatpush1.msra.mxu0 0.0
        %1876 = vmatprep.subr.mxu0 0.0
        %1877 = vmatpush1.msra.mxu0 0.0
        %1878 = vmatprep.subr.mxu0 0.0
        %1879 = vmatpush1.msra.mxu0 0.0
        %1880 = vmatprep.subr.mxu0 0.0
        %1881 = vmatpush1.msra.mxu0 0.0
        %1882 = vmatprep.subr.mxu0 0.0
        %1883 = vmatpush1.msra.mxu0 0.0
        %1884 = vmatprep.subr.mxu0 0.0
        %1885 = vmatpush1.msra.mxu0 0.0
        %1886 = vmatprep.subr.mxu0 0.0
        %1887 = vmatpush1.msra.mxu0 0.0
        %1888 = vmatprep.subr.mxu0 0.0
        %1889 = vmatpush1.msra.mxu0 0.0
        %1890 = vmatprep.subr.mxu0 0.0
        %1891 = vmatpush1.msra.mxu0 %v837
        %1892 = vmatprep.subr.mxu0 0.0
        %1893 = vmatpush1.msra.mxu0 %v836
        %1894 = vmatprep.subr.mxu0 0.0
        %1895 = vmatpush2.msra.mxu0 0.0
        %1896 = vmatprep.subr.mxu0 0.0
        %1897 = vmatpush2.msra.mxu0 0.0
        %1898 = vmatprep.subr.mxu0 0.0
        %1899 = vmatpush2.msra.mxu0 0.0
        %1900 = vmatprep.subr.mxu0 0.0
        %1901 = vmatpush2.msra.mxu0 0.0
        %1902 = vmatprep.subr.mxu0 0.0
        %1903 = vmatpush2.msra.mxu0 0.0
        %1904 = vmatprep.subr.mxu0 0.0
        %1905 = vmatpush2.msra.mxu0 0.0
        %1906 = vmatprep.subr.mxu0 0.0
        %1907 = vmatpush2.msra.mxu0 0.0
        %1908 = vmatprep.subr.mxu0 0.0
        %1909 = vmatpush2.msra.mxu0 0.0
        %1910 = vmatprep.subr.mxu0 0.0
        %1911 = vmatpush2.msra.mxu0 0.0
        %1912 = vmatprep.subr.mxu0 0.0
        %1913 = vmatpush2.msra.mxu0 0.0
        %1914 = vmatprep.subr.mxu0 0.0
        %1915 = vmatpush2.msra.mxu0 0.0
        %1916 = vmatprep.subr.mxu0 0.0
        %1917 = vmatpush2.msra.mxu0 0.0
        %1918 = vmatprep.subr.mxu0 0.0
        %1919 = vmatpush2.msra.mxu0 0.0
        %1920 = vmatprep.subr.mxu0 0.0
        %1921 = vmatpush2.msra.mxu0 0.0
        %1922 = vmatprep.subr.mxu0 0.0
        %1923 = vmatpush2.msra.mxu0 0.0
        %1924 = vmatprep.subr.mxu0 0.0
        %1925 = vmatpush2.msra.mxu0 0.0
        %1926 = vmatprep.mubr.f32.mxu0 0.0
        %1927 = vmatmul.mubr.f32.gmra.mxu0 %v1851
        %v1928 = vpop.f32.mrf.mxu0
        %v1929 = vadd.f32 0.0, %v1928
        %v1930 = vpop.f32.mrf.mxu0
        %1931 = vmatprep.mubr.f32.mxu0 0.0
        %1932 = vmatmul.mubr.f32.gmra.mxu0 %v1854
        %v1933 = vpop.f32.mrf.mxu0
        %v1934 = vadd.f32 0.0, %v1933
        %v1935 = vpop.f32.mrf.mxu0
        %1936 = vmatprep.mubr.f32.mxu0 0.0
        %1937 = vmatmul.mubr.f32.gmra.mxu0 %v1857
        %v1938 = vpop.f32.mrf.mxu0
        %v1939 = vadd.f32 0.0, %v1938
        %v1940 = vpop.f32.mrf.mxu0
        %1941 = vmatprep.mubr.f32.mxu0 0.0
        %1942 = vmatmul.mubr.f32.gmra.mxu0 %v1860
        %v1943 = vpop.f32.mrf.mxu0
        %v1944 = vadd.f32 0.0, %v1943
        %v1945 = vpop.f32.mrf.mxu0
        %1946 = vdwg.mxu0
        %v1948 = vlaneseq
        %v1949 = vshrl.u32 %v1948, 7
        %v1950 = vsub.s32 0, %v1949
        %v1951 = vrot.slane %v1817, %v1950
        %v1953 = vmul.f32 %v1797, %v1951
        %v1954 = vmul.f32 %v1798, %v1951
        %v1956 = vsel %vm840, %v1953, 0
        %v1959 = vsel %vm840, %v1954, 0
        %1961 = vmatprep.subr.mxu0 0.0
        %1962 = vmatpush1.msra.mxu0 0.0
        %1963 = vmatprep.subr.mxu0 0.0
        %1964 = vmatpush1.msra.mxu0 0.0
        %1965 = vmatprep.subr.mxu0 0.0
        %1966 = vmatpush1.msra.mxu0 0.0
        %1967 = vmatprep.subr.mxu0 0.0
        %1968 = vmatpush1.msra.mxu0 0.0
        %1969 = vmatprep.subr.mxu0 0.0
        %1970 = vmatpush1.msra.mxu0 0.0
        %1971 = vmatprep.subr.mxu0 0.0
        %1972 = vmatpush1.msra.mxu0 0.0
        %1973 = vmatprep.subr.mxu0 0.0
        %1974 = vmatpush1.msra.mxu0 0.0
        %1975 = vmatprep.subr.mxu0 0.0
        %1976 = vmatpush1.msra.mxu0 0.0
        %1977 = vmatprep.subr.mxu0 0.0
        %1978 = vmatpush1.msra.mxu0 0.0
        %1979 = vmatprep.subr.mxu0 0.0
        %1980 = vmatpush1.msra.mxu0 0.0
        %1981 = vmatprep.subr.mxu0 0.0
        %1982 = vmatpush1.msra.mxu0 0.0
        %1983 = vmatprep.subr.mxu0 0.0
        %1984 = vmatpush1.msra.mxu0 0.0
        %1985 = vmatprep.subr.mxu0 0.0
        %1986 = vmatpush1.msra.mxu0 %v1944
        %1987 = vmatprep.subr.mxu0 0.0
        %1988 = vmatpush1.msra.mxu0 %v1939
        %1989 = vmatprep.subr.mxu0 0.0
        %1990 = vmatpush1.msra.mxu0 %v1934
        %1991 = vmatprep.subr.mxu0 0.0
        %1992 = vmatpush1.msra.mxu0 %v1929
        %1993 = vmatprep.subr.mxu0 0.0
        %1994 = vmatpush2.msra.mxu0 0.0
        %1995 = vmatprep.subr.mxu0 0.0
        %1996 = vmatpush2.msra.mxu0 0.0
        %1997 = vmatprep.subr.mxu0 0.0
        %1998 = vmatpush2.msra.mxu0 0.0
        %1999 = vmatprep.subr.mxu0 0.0
        %2000 = vmatpush2.msra.mxu0 0.0
        %2001 = vmatprep.subr.mxu0 0.0
        %2002 = vmatpush2.msra.mxu0 0.0
        %2003 = vmatprep.subr.mxu0 0.0
        %2004 = vmatpush2.msra.mxu0 0.0
        %2005 = vmatprep.subr.mxu0 0.0
        %2006 = vmatpush2.msra.mxu0 0.0
        %2007 = vmatprep.subr.mxu0 0.0
        %2008 = vmatpush2.msra.mxu0 0.0
        %2009 = vmatprep.subr.mxu0 0.0
        %2010 = vmatpush2.msra.mxu0 0.0
        %2011 = vmatprep.subr.mxu0 0.0
        %2012 = vmatpush2.msra.mxu0 0.0
        %2013 = vmatprep.subr.mxu0 0.0
        %2014 = vmatpush2.msra.mxu0 0.0
        %2015 = vmatprep.subr.mxu0 0.0
        %2016 = vmatpush2.msra.mxu0 0.0
        %2017 = vmatprep.subr.mxu0 0.0
        %2018 = vmatpush2.msra.mxu0 0.0
        %2019 = vmatprep.subr.mxu0 0.0
        %2020 = vmatpush2.msra.mxu0 0.0
        %2021 = vmatprep.subr.mxu0 0.0
        %2022 = vmatpush2.msra.mxu0 0.0
        %2023 = vmatprep.subr.mxu0 0.0
        %2024 = vmatpush2.msra.mxu0 0.0
        %2025 = vmatprep.mubr.f32.mxu0 0.0
        %2026 = vmatmul.mubr.f32.gmra.mxu0 %v1956
        %v2027 = vpop.f32.mrf.mxu0
        %v2028 = vadd.f32 0.0, %v2027
        %v2029 = vpop.f32.mrf.mxu0
        %2030 = vmatprep.mubr.f32.mxu0 0.0
        %2031 = vmatmul.mubr.f32.gmra.mxu0 %v1959
        %v2032 = vpop.f32.mrf.mxu0
        %v2033 = vadd.f32 0.0, %v2032
        %v2034 = vpop.f32.mrf.mxu0
        %2035 = vdwg.mxu0
        %v2036 = vmul.f32 %v2028, %v2028
        %v2037 = vmul.f32 %v2033, %v2033
        %v2038 = vmul.f32 %v2028, %v2036
        %v2039 = vmul.f32 %v2033, %v2037
        %v2040 = vmul.f32 %v2038, 0.044715
        %v2041 = vmul.f32 %v2039, 0.044715
        %v2042 = vadd.f32 %v2028, %v2040
        %v2043 = vadd.f32 %v2033, %v2041
        %v2044 = vmul.f32 %v2042, 0.7978846
        %v2045 = vmul.f32 %v2043, 0.7978846
        %v2046 = vtanh.pop %v2044
        %v2047 = vtanh.pop %v2045
        %v2048 = vadd.f32 %v2046, 1.0
        %v2049 = vadd.f32 %v2047, 1.0
        %v2050 = vmul.f32 %v2048, 0.5
        %v2051 = vmul.f32 %v2049, 0.5
        %v2052 = vmul.f32 %v2028, %v2050
        %v2053 = vmul.f32 %v2033, %v2051
        %2054 = vst.msk [vmem:[%s820] sm:$0xff] %vm840, %v1797
        %2055 = vst.msk [vmem:[%s820 + $0x8] sm:$0xff] %vm840, %v1798
        %2056 = vst.msk [vmem:[%s827] sm:$0xff] %vm840, %v2052
        %2057 = vst.msk [vmem:[%s827 + $0x8] sm:$0xff] %vm840, %v2053
        %s2058 = sand.u32 %s485, 1
        %s2059 = scalar_lea.sflag [#allocation4], %s2058
        %s2060 = sand.u32 %s485, 1
        %s2061 = smul.addr %s2060, 16
        %s2062 = scalar_lea.vmem [#allocation19], %s2061
        %s2063 = sand.u32 %s511, 1
        %s2064 = scalar_lea.sflag [#allocation21], %s2063
        %s2065 = sand.u32 %s511, 1
        %s2066 = smul.addr %s2065, 16
        %s2067 = scalar_lea.vmem [#allocation20], %s2066
        // Predicated region
        $region141: #{tpu_custom_call.1} parent=99 // pred_check
          %p2068 = pneg %p495
        $region142: #{tpu_custom_call.1} parent=99 // pred_check_branch
          %2070 = sbr.rel (%p2068) target = $region144
        $region143: #{tpu_custom_call.1} parent=99 // pred_region
          %s2072 = ssub.s32 256, 256
          %2073 = vsyncadd %s2059, %s2072
          %s2074 = smul.addr %s47, 2
          %s2075 = smul.addr %s2074, 128
          %s2076 = scalar_lea.hbm %s20, %s2075
          %s2077 = sshll.u32 %s2062, 4
          %s2078 = int_to_ptr.vmem [resolvable:$true] %s2077
          %2083 = dma.vmem_to_hbm [thread:$0]  %s2078, 256, %s2076, %s2059, 128, 128, 8
        $region144: #{tpu_custom_call.1} parent=99 // pred_fallthru
          _
        // Predicated region
        $region145: #{tpu_custom_call.1} parent=99 // pred_check
          %p2084 = pneg %p521
        $region146: #{tpu_custom_call.1} parent=99 // pred_check_branch
          %2086 = sbr.rel (%p2084) target = $region148
        $region147: #{tpu_custom_call.1} parent=99 // pred_region
          %s2088 = ssub.s32 256, 256
          %2089 = vsyncadd %s2064, %s2088
          %s2090 = smul.addr %s47, 2
          %s2091 = smul.addr %s2090, 128
          %s2092 = scalar_lea.hbm %s21, %s2091
          %s2093 = sshll.u32 %s2067, 4
          %s2094 = int_to_ptr.vmem [resolvable:$true] %s2093
          %2099 = dma.vmem_to_hbm [thread:$0]  %s2094, 256, %s2092, %s2064, 128, 128, 8
        $region148: #{tpu_custom_call.1} parent=99 // pred_fallthru
          _
      $region100: #{tpu_custom_call.1} parent=5 // pred_fallthru
        _
      %p2100 = scmp.le.s32.totalorder 2, %s42
      // Predicated region
      $region149: #{tpu_custom_call.1} parent=5 // pred_check
        %p2101 = pneg %p2100
      $region150: #{tpu_custom_call.1} parent=5 // pred_check_branch
        %2103 = sbr.rel (%p2101) target = $region152
      $region151: #{tpu_custom_call.1} parent=5 // pred_region
        %s2104 = ssub.s32 %s42, 2
        // Predicated region
        $region153: #{tpu_custom_call.1} parent=151 // pred_check
          %p2105 = pneg %p501
        $region154: #{tpu_custom_call.1} parent=151 // pred_check_branch
          %2107 = sbr.rel (%p2105) target = $region156
        $region155: #{tpu_custom_call.1} parent=151 // pred_region
          %s2108 = sand.u32 %s486, 1
          %s2109 = scalar_lea.sflag [#allocation4], %s2108
          %s2110 = sand.u32 %s486, 1
          %s2111 = smul.addr %s2110, 16
          %s2112 = scalar_lea.vmem [#allocation19], %s2111
          %2113 = dma.done %s2109, 256
        $region156: #{tpu_custom_call.1} parent=151 // pred_fallthru
          _
        // Predicated region
        $region157: #{tpu_custom_call.1} parent=151 // pred_check
          %p2114 = pneg %p527
        $region158: #{tpu_custom_call.1} parent=151 // pred_check_branch
          %2116 = sbr.rel (%p2114) target = $region160
        $region159: #{tpu_custom_call.1} parent=151 // pred_region
          %s2117 = sand.u32 %s512, 1
          %s2118 = scalar_lea.sflag [#allocation21], %s2117
          %s2119 = sand.u32 %s512, 1
          %s2120 = smul.addr %s2119, 16
          %s2121 = scalar_lea.vmem [#allocation20], %s2120
          %2122 = dma.done %s2118, 256
        $region160: #{tpu_custom_call.1} parent=151 // pred_fallthru
          _
      $region152: #{tpu_custom_call.1} parent=5 // pred_fallthru
        _
    $region6: #{tpu_custom_call.1} parent=1 // loop_footer
      %s46 = sadd.s32 1, %s42
    $region7: #{tpu_custom_call.1} parent=1 // loop_footer_branch
      %41 = sbr.rel target = $region3
    $region8: #{tpu_custom_call.1} parent=1 // loop_exit
      _
    %2123 = vsyncpa [#allocation3], 1
    %s2124 = scalar_lea.sflag [#allocation3], 1
    %2125 = vsyncpa %s2124, 1
    %2126 = vsyncpa [#allocation6], 1
    %2127 = vsyncpa [#allocation9], 1
    %2128 = vsyncpa [#allocation12], 1
    %2129 = vsyncpa [#allocation15], 1
    %2130 = vsyncpa [#allocation18], 1
    %2131 = vsyncpa [#allocation4], 1
    %s2132 = scalar_lea.sflag [#allocation4], 1
    %2133 = vsyncpa %s2132, 1
    %2134 = vsyncpa [#allocation21], 1
    %s2135 = scalar_lea.sflag [#allocation21], 1
    %2136 = vsyncpa %s2135, 1

</llo_original>
